<compile_context>
chip_gen: v6e
topology: v6e:2x2x1
jax: 0.10.0
libtpu: 0.0.40
codegen_flags: <defaults>
</compile_context>

<pallas_src>
import functools

import jax
import jax.numpy as jnp
from jax.experimental import pallas as pl
from jax.experimental.pallas import tpu as pltpu

LANE = 128


def _round_up(x, m):
    return (x + m - 1) // m * m


# ---------------------------------------------------------------------------
# Kernel 1: per-node feature projection
#   xr   = x @ w_rel            (bf16 output, feeds the aggregation MXU matmul)
#   root = x @ w_root + b       (f32 output, added at aggregation finalize)
# ---------------------------------------------------------------------------
def _proj_kernel(x_ref, wrel_ref, wroot_ref, b_ref, xr_ref, root_ref):
    x = x_ref[...]
    xr = jnp.dot(x, wrel_ref[...], preferred_element_type=jnp.float32)
    root = jnp.dot(x, wroot_ref[...], preferred_element_type=jnp.float32) + b_ref[...]
    xr_ref[...] = xr.astype(xr_ref.dtype)
    root_ref[...] = root.astype(root_ref.dtype)


def _project(x, w_rel, w_root, b, *, tm):
    n_pad, f_pad = x.shape
    h_pad = w_rel.shape[1]
    return pl.pallas_call(
        _proj_kernel,
        out_shape=(
            jax.ShapeDtypeStruct((n_pad, h_pad), jnp.bfloat16),
            jax.ShapeDtypeStruct((n_pad, h_pad), jnp.float32),
        ),
        grid=(n_pad // tm,),
        in_specs=[
            pl.BlockSpec((tm, f_pad), lambda i: (i, 0)),
            pl.BlockSpec((f_pad, h_pad), lambda i: (0, 0)),
            pl.BlockSpec((f_pad, h_pad), lambda i: (0, 0)),
            pl.BlockSpec((1, h_pad), lambda i: (0, 0)),
        ],
        out_specs=[
            pl.BlockSpec((tm, h_pad), lambda i: (i, 0)),
            pl.BlockSpec((tm, h_pad), lambda i: (i, 0)),
        ],
        compiler_params=pltpu.CompilerParams(
            dimension_semantics=("parallel",)),
    )(x, w_rel, w_root, b)


# ---------------------------------------------------------------------------
# Kernel 2: tiled neighbor aggregation + finalize
#   out[i] = maybe_relu( sum_k A[i, k] @ xr[k]  +  root[i] )
# ---------------------------------------------------------------------------
def _agg_kernel(a_ref, xr_ref, root_ref, o_ref, acc_ref, *, relu):
    k = pl.program_id(1)

    @pl.when(k == 0)
    def _():
        acc_ref[...] = jnp.zeros_like(acc_ref)

    acc_ref[...] += jnp.dot(a_ref[...], xr_ref[...],
                            preferred_element_type=jnp.float32)

    @pl.when(k == pl.num_programs(1) - 1)
    def _():
        out = acc_ref[...] + root_ref[...]
        if relu:
            out = jnp.maximum(out, 0.0)
        o_ref[...] = out.astype(o_ref.dtype)


def _aggregate(adj, xr, root, *, tm, tk, relu, out_dtype):
    n_pad = adj.shape[0]
    h_pad = xr.shape[1]
    return pl.pallas_call(
        functools.partial(_agg_kernel, relu=relu),
        out_shape=jax.ShapeDtypeStruct((n_pad, h_pad), out_dtype),
        grid=(n_pad // tm, n_pad // tk),
        in_specs=[
            pl.BlockSpec((tm, tk), lambda i, k: (i, k)),
            pl.BlockSpec((tk, h_pad), lambda i, k: (k, 0)),
            pl.BlockSpec((tm, h_pad), lambda i, k: (i, 0)),
        ],
        out_specs=pl.BlockSpec((tm, h_pad), lambda i, k: (i, 0)),
        scratch_shapes=[pltpu.VMEM((tm, h_pad), jnp.float32)],
        compiler_params=pltpu.CompilerParams(
            dimension_semantics=("parallel", "arbitrary")),
    )(adj, xr, root)


def _graph_conv(adj, x, w_rel, b_rel, w_root, *, tm, tk, relu, out_dtype):
    xr, root = _project(x, w_rel, w_root, b_rel, tm=tm)
    return _aggregate(adj, xr, root, tm=tm, tk=tk, relu=relu, out_dtype=out_dtype)


def _pad2(a, rows, cols, dtype):
    out = jnp.zeros((rows, cols), dtype)
    return out.at[: a.shape[0], : a.shape[1]].set(a.astype(dtype))


def gnn_encoder(x, edge_index, params, *, tile=512):
    """Full GNNEncoder forward: relu(conv1(x, ei)) -> conv2(x, ei)."""
    n, f_in = x.shape
    h1 = params["w_rel1"].shape[1]
    h2 = params["w_rel2"].shape[1]

    # Tiling / padding: feature dims -> 128 lanes (lane-dense stores),
    # node dim -> a multiple of the (dst, src) tile size.
    tm = tk = tile if n > tile else _round_up(max(n, 1), LANE)
    n_pad = _round_up(n, tm)
    f_pad = _round_up(f_in, LANE)
    h1_pad = _round_up(h1, LANE)
    h2_pad = _round_up(h2, LANE)

    # Glue: densify the edge list (scatter-add of ones) -> A[dst, src].
    # bf16 is exact for integer edge multiplicities up to 256.
    src, dst = edge_index[0], edge_index[1]
    adj = (jnp.zeros((n_pad, n_pad), jnp.float32)
           .at[dst, src].add(1.0)
           .astype(jnp.bfloat16))
    # TODO(synk): for large sparse graphs, replace the dense N^2 adjacency with
    # a scalar-prefetch CSR gather-accumulate, and fuse both layers into one
    # pallas_call so A is streamed from HBM only once.

    x_p = _pad2(x, n_pad, f_pad, jnp.bfloat16)
    wr1 = _pad2(params["w_rel1"], f_pad, h1_pad, jnp.bfloat16)
    wo1 = _pad2(params["w_root1"], f_pad, h1_pad, jnp.bfloat16)
    b1 = _pad2(params["b_rel1"], 1, h1_pad, jnp.float32)
    wr2 = _pad2(params["w_rel2"], h1_pad, h2_pad, jnp.bfloat16)
    wo2 = _pad2(params["w_root2"], h1_pad, h2_pad, jnp.bfloat16)
    b2 = _pad2(params["b_rel2"], 1, h2_pad, jnp.float32)

    # Layer 1 output stays bf16 (it feeds layer 2's MXU matmuls directly).
    h = _graph_conv(adj, x_p, wr1, b1, wo1, tm=tm, tk=tk, relu=True,
                    out_dtype=jnp.bfloat16)
    out = _graph_conv(adj, h, wr2, b2, wo2, tm=tm, tk=tk, relu=False,
                      out_dtype=jnp.float32)
    return out[:n, :h2]


def _reference(x, edge_index, params):
    """Pure-JAX GraphConv reference with the same bf16-operand /
    f32-accumulate numerics as the kernels."""
    q = lambda a: a.astype(jnp.bfloat16).astype(jnp.float32)
    n = x.shape[0]
    adj = q(jnp.zeros((n, n), jnp.float32)
            .at[edge_index[1], edge_index[0]].add(1.0))

    def conv(xx, wr, br, wo):
        xq = q(xx)
        xr = q(xq @ q(wr))          # projection kernel stores xr in bf16
        root = xq @ q(wo) + br      # bias added in f32
        return adj @ xr + root

    h = q(jax.nn.relu(conv(x, params["w_rel1"], params["b_rel1"],
                           params["w_root1"])))
    return conv(h, params["w_rel2"], params["b_rel2"], params["w_root2"])


if __name__ == "__main__":
    key = jax.random.PRNGKey(0)
    k_x, k_e, k1, k2, k3, k4, k5 = jax.random.split(key, 7)

    # Small synthetic graph.
    num_nodes = 16
    num_edges = 40
    in_channels = 16
    hidden_channels = 32
    out_channels = 8

    x = jax.random.normal(k_x, (num_nodes, in_channels), jnp.float32)
    edge_index = jax.random.randint(k_e, (2, num_edges), 0, num_nodes, jnp.int32)

    # Deterministic parameter init (shapes mirror GraphConv's lin_rel / lin_root,
    # already transposed to (in, out)).
    def init(k, shape, fan_in):
        bound = 1.0 / jnp.sqrt(jnp.float32(fan_in))
        return jax.random.uniform(k, shape, jnp.float32, -bound, bound)

    params = {
        # conv1: in_channels -> hidden_channels
        "w_rel1": init(k1, (in_channels, hidden_channels), in_channels),
        "b_rel1": init(k2, (1, hidden_channels), in_channels),
        "w_root1": init(k3, (in_channels, hidden_channels), in_channels),
        # conv2: hidden_channels -> out_channels
        "w_rel2": init(k4, (hidden_channels, out_channels), hidden_channels),
        "b_rel2": jnp.zeros((1, out_channels), jnp.float32),
        "w_root2": init(k5, (hidden_channels, out_channels), hidden_channels),
    }

    out = jax.block_until_ready(jax.jit(gnn_encoder)(x, edge_index, params))
    ref = _reference(x, edge_index, params)

    assert out.shape == (num_nodes, out_channels)
    assert jnp.allclose(out, ref, atol=2e-3, rtol=2e-3), (
        f"mismatch vs reference, max abs err {jnp.max(jnp.abs(out - ref)):.3e}")
    print("KERNEL_OK")
</pallas_src>

<mosaic_0001>
module attributes {stable_mosaic.version = 11 : i64} {
  func.func private @main(%arg0: i32) attributes {dimension_semantics = [#tpu.dimension_semantics<core_parallel>], iteration_bounds = array<i64: 2>, tpu.core_type = #tpu.core_type<sc_scalar_subcore>, window_params = []} {
    return
  }
}

module attributes {stable_mosaic.version = 11 : i64} {
  func.func private @main(%arg0: i32) attributes {dimension_semantics = [#tpu.dimension_semantics<core_parallel>], iteration_bounds = array<i64: 2>, tpu.core_type = #tpu.core_type<sc_scalar_subcore>, window_params = []} {
    return
  }
}

module attributes {stable_mosaic.version = 11 : i64} {
  func.func @_proj_kernel(%arg0: i32, %arg1: memref<128x128xbf16, #tpu.memory_space<vmem>>, %arg2: memref<128x128xbf16, #tpu.memory_space<vmem>>, %arg3: memref<128x128xbf16, #tpu.memory_space<vmem>>, %arg4: memref<1x128xf32, #tpu.memory_space<vmem>>, %arg5: memref<128x128xbf16, #tpu.memory_space<vmem>>, %arg6: memref<128x128xf32, #tpu.memory_space<vmem>>) attributes {dimension_semantics = [#tpu.dimension_semantics<parallel>], iteration_bounds = array<i64: 1>, scalar_prefetch = 0 : i64, scratch_operands = 0 : i64, tpu.core_type = #tpu.core_type<tc>, window_params = [{transform_indices = @transform_0, window_bounds = array<i64: 128, 128>}, {pipeline_mode = #tpu.pipeline_mode<synchronous>, transform_indices = @transform_1, window_bounds = array<i64: 128, 128>}, {pipeline_mode = #tpu.pipeline_mode<synchronous>, transform_indices = @transform_2, window_bounds = array<i64: 128, 128>}, {pipeline_mode = #tpu.pipeline_mode<synchronous>, transform_indices = @transform_3, window_bounds = array<i64: 1, 128>}, {transform_indices = @transform_4, window_bounds = array<i64: 128, 128>}, {transform_indices = @transform_5, window_bounds = array<i64: 128, 128>}]} {
    %c0 = arith.constant 0 : index
    %c0_0 = arith.constant 0 : index
    %0 = vector.load %arg1[%c0, %c0_0] : memref<128x128xbf16, #tpu.memory_space<vmem>>, vector<128x128xbf16>
    %c0_1 = arith.constant 0 : index
    %c0_2 = arith.constant 0 : index
    %1 = vector.load %arg2[%c0_1, %c0_2] : memref<128x128xbf16, #tpu.memory_space<vmem>>, vector<128x128xbf16>
    %cst = arith.constant dense<0.000000e+00> : vector<128x128xf32>
    %2 = tpu.matmul %0, %1, %cst {dimension_numbers = #tpu.dot_dimension_numbers<[1], [0], [0], [1], [0, 0, 1, 1], [], []>} : vector<128x128xbf16>, vector<128x128xbf16>, vector<128x128xf32> -> vector<128x128xf32>
    %c0_3 = arith.constant 0 : index
    %c0_4 = arith.constant 0 : index
    %3 = vector.load %arg3[%c0_3, %c0_4] : memref<128x128xbf16, #tpu.memory_space<vmem>>, vector<128x128xbf16>
    %cst_5 = arith.constant dense<0.000000e+00> : vector<128x128xf32>
    %4 = tpu.matmul %0, %3, %cst_5 {dimension_numbers = #tpu.dot_dimension_numbers<[1], [0], [0], [1], [0, 0, 1, 1], [], []>} : vector<128x128xbf16>, vector<128x128xbf16>, vector<128x128xf32> -> vector<128x128xf32>
    %c0_6 = arith.constant 0 : index
    %c0_7 = arith.constant 0 : index
    %5 = vector.load %arg4[%c0_6, %c0_7] : memref<1x128xf32, #tpu.memory_space<vmem>>, vector<1x128xf32>
    %6 = vector.broadcast %5 : vector<1x128xf32> to vector<128x128xf32>
    %7 = arith.addf %4, %6 : vector<128x128xf32>
    %8 = arith.truncf %2 : vector<128x128xf32> to vector<128x128xbf16>
    %c0_8 = arith.constant 0 : index
    %c0_9 = arith.constant 0 : index
    %9 = vector.load %arg5[%c0_8, %c0_9] : memref<128x128xbf16, #tpu.memory_space<vmem>>, vector<128x128xbf16>
    tpu.vector_store %arg5[%c0_8, %c0_9], %8 {strides = array<i32>} : memref<128x128xbf16, #tpu.memory_space<vmem>>, vector<128x128xbf16>,
    %c0_10 = arith.constant 0 : index
    %c0_11 = arith.constant 0 : index
    %10 = vector.load %arg6[%c0_10, %c0_11] : memref<128x128xf32, #tpu.memory_space<vmem>>, vector<128x128xf32>
    tpu.vector_store %arg6[%c0_10, %c0_11], %7 {strides = array<i32>} : memref<128x128xf32, #tpu.memory_space<vmem>>, vector<128x128xf32>,
    return
  }
  func.func @transform_0(%arg0: i32) -> (i32, i32) {
    %c0_i32 = arith.constant 0 : i32
    %c0_i32_0 = arith.constant 0 : i32
    return %arg0, %c0_i32 : i32, i32
  }
  func.func @transform_1(%arg0: i32) -> (i32, i32) {
    %c0_i32 = arith.constant 0 : i32
    %c0_i32_0 = arith.constant 0 : i32
    %c0_i32_1 = arith.constant 0 : i32
    return %c0_i32, %c0_i32_0 : i32, i32
  }
  func.func @transform_2(%arg0: i32) -> (i32, i32) {
    %c0_i32 = arith.constant 0 : i32
    %c0_i32_0 = arith.constant 0 : i32
    %c0_i32_1 = arith.constant 0 : i32
    return %c0_i32, %c0_i32_0 : i32, i32
  }
  func.func @transform_3(%arg0: i32) -> (i32, i32) {
    %c0_i32 = arith.constant 0 : i32
    %c0_i32_0 = arith.constant 0 : i32
    %c0_i32_1 = arith.constant 0 : i32
    return %c0_i32, %c0_i32_0 : i32, i32
  }
  func.func @transform_4(%arg0: i32) -> (i32, i32) {
    %c0_i32 = arith.constant 0 : i32
    %c0_i32_0 = arith.constant 0 : i32
    return %arg0, %c0_i32 : i32, i32
  }
  func.func @transform_5(%arg0: i32) -> (i32, i32) {
    %c0_i32 = arith.constant 0 : i32
    %c0_i32_0 = arith.constant 0 : i32
    return %arg0, %c0_i32 : i32, i32
  }
}

module attributes {stable_mosaic.version = 11 : i64} {
  func.func @_agg_kernel(%arg0: i32, %arg1: i32, %arg2: memref<128x128xbf16, #tpu.memory_space<vmem>>, %arg3: memref<128x128xbf16, #tpu.memory_space<vmem>>, %arg4: memref<128x128xf32, #tpu.memory_space<vmem>>, %arg5: memref<128x128xbf16, #tpu.memory_space<vmem>>, %arg6: memref<128x128xf32, #tpu.memory_space<vmem>>) attributes {dimension_semantics = [#tpu.dimension_semantics<parallel>, #tpu.dimension_semantics<arbitrary>], iteration_bounds = array<i64: 1, 1>, scalar_prefetch = 0 : i64, scratch_operands = 1 : i64, tpu.core_type = #tpu.core_type<tc>, window_params = [{transform_indices = @transform_0, window_bounds = array<i64: 128, 128>}, {transform_indices = @transform_1, window_bounds = array<i64: 128, 128>}, {transform_indices = @transform_2, window_bounds = array<i64: 128, 128>}, {transform_indices = @transform_3, window_bounds = array<i64: 128, 128>}]} {
    %c0_i32 = arith.constant 0 : i32
    %0 = arith.cmpi eq, %arg1, %c0_i32 : i32
    %1 = arith.extui %0 : i1 to i32
    %c0_i32_0 = arith.constant 0 : i32
    %2 = arith.cmpi ne, %1, %c0_i32_0 : i32
    scf.if %2 {
      %cst_10 = arith.constant 0.000000e+00 : f32
      %12 = vector.broadcast %cst_10 : f32 to vector<128x128xf32>
      %c0_11 = arith.constant 0 : index
      %c0_12 = arith.constant 0 : index
      %13 = vector.load %arg6[%c0_11, %c0_12] : memref<128x128xf32, #tpu.memory_space<vmem>>, vector<128x128xf32>
      tpu.vector_store %arg6[%c0_11, %c0_12], %12 {strides = array<i32>} : memref<128x128xf32, #tpu.memory_space<vmem>>, vector<128x128xf32>,
    } else {
    }
    %c0 = arith.constant 0 : index
    %c0_1 = arith.constant 0 : index
    %3 = vector.load %arg6[%c0, %c0_1] : memref<128x128xf32, #tpu.memory_space<vmem>>, vector<128x128xf32>
    %c0_2 = arith.constant 0 : index
    %c0_3 = arith.constant 0 : index
    %4 = vector.load %arg2[%c0_2, %c0_3] : memref<128x128xbf16, #tpu.memory_space<vmem>>, vector<128x128xbf16>
    %c0_4 = arith.constant 0 : index
    %c0_5 = arith.constant 0 : index
    %5 = vector.load %arg3[%c0_4, %c0_5] : memref<128x128xbf16, #tpu.memory_space<vmem>>, vector<128x128xbf16>
    %cst = arith.constant dense<0.000000e+00> : vector<128x128xf32>
    %6 = tpu.matmul %4, %5, %cst {dimension_numbers = #tpu.dot_dimension_numbers<[1], [0], [0], [1], [0, 0, 1, 1], [], []>} : vector<128x128xbf16>, vector<128x128xbf16>, vector<128x128xf32> -> vector<128x128xf32>
    %7 = arith.addf %3, %6 : vector<128x128xf32>
    %c0_6 = arith.constant 0 : index
    %c0_7 = arith.constant 0 : index
    %8 = vector.load %arg6[%c0_6, %c0_7] : memref<128x128xf32, #tpu.memory_space<vmem>>, vector<128x128xf32>
    tpu.vector_store %arg6[%c0_6, %c0_7], %7 {strides = array<i32>} : memref<128x128xf32, #tpu.memory_space<vmem>>, vector<128x128xf32>,
    %c0_i32_8 = arith.constant 0 : i32
    %9 = arith.cmpi eq, %arg1, %c0_i32_8 : i32
    %10 = arith.extui %9 : i1 to i32
    %c0_i32_9 = arith.constant 0 : i32
    %11 = arith.cmpi ne, %10, %c0_i32_9 : i32
    scf.if %11 {
      %c0_10 = arith.constant 0 : index
      %c0_11 = arith.constant 0 : index
      %12 = vector.load %arg6[%c0_10, %c0_11] : memref<128x128xf32, #tpu.memory_space<vmem>>, vector<128x128xf32>
      %c0_12 = arith.constant 0 : index
      %c0_13 = arith.constant 0 : index
      %13 = vector.load %arg4[%c0_12, %c0_13] : memref<128x128xf32, #tpu.memory_space<vmem>>, vector<128x128xf32>
      %14 = arith.addf %12, %13 : vector<128x128xf32>
      %cst_14 = arith.constant 0.000000e+00 : f32
      %15 = vector.broadcast %cst_14 : f32 to vector<128x128xf32>
      %16 = arith.maximumf %14, %15 : vector<128x128xf32>
      %17 = arith.truncf %16 : vector<128x128xf32> to vector<128x128xbf16>
      %c0_15 = arith.constant 0 : index
      %c0_16 = arith.constant 0 : index
      %18 = vector.load %arg5[%c0_15, %c0_16] : memref<128x128xbf16, #tpu.memory_space<vmem>>, vector<128x128xbf16>
      tpu.vector_store %arg5[%c0_15, %c0_16], %17 {strides = array<i32>} : memref<128x128xbf16, #tpu.memory_space<vmem>>, vector<128x128xbf16>,
    } else {
    }
    return
  }
  func.func @transform_0(%arg0: i32, %arg1: i32) -> (i32, i32) {
    %c0_i32 = arith.constant 0 : i32
    return %arg0, %arg1 : i32, i32
  }
  func.func @transform_1(%arg0: i32, %arg1: i32) -> (i32, i32) {
    %c0_i32 = arith.constant 0 : i32
    %c0_i32_0 = arith.constant 0 : i32
    return %arg1, %c0_i32 : i32, i32
  }
  func.func @transform_2(%arg0: i32, %arg1: i32) -> (i32, i32) {
    %c0_i32 = arith.constant 0 : i32
    %c0_i32_0 = arith.constant 0 : i32
    return %arg0, %c0_i32 : i32, i32
  }
  func.func @transform_3(%arg0: i32, %arg1: i32) -> (i32, i32) {
    %c0_i32 = arith.constant 0 : i32
    %c0_i32_0 = arith.constant 0 : i32
    return %arg0, %c0_i32 : i32, i32
  }
}

module attributes {stable_mosaic.version = 11 : i64} {
  func.func @_agg_kernel(%arg0: i32, %arg1: i32, %arg2: memref<128x128xbf16, #tpu.memory_space<vmem>>, %arg3: memref<128x128xbf16, #tpu.memory_space<vmem>>, %arg4: memref<128x128xf32, #tpu.memory_space<vmem>>, %arg5: memref<128x128xf32, #tpu.memory_space<vmem>>, %arg6: memref<128x128xf32, #tpu.memory_space<vmem>>) attributes {dimension_semantics = [#tpu.dimension_semantics<parallel>, #tpu.dimension_semantics<arbitrary>], iteration_bounds = array<i64: 1, 1>, scalar_prefetch = 0 : i64, scratch_operands = 1 : i64, tpu.core_type = #tpu.core_type<tc>, window_params = [{transform_indices = @transform_0, window_bounds = array<i64: 128, 128>}, {transform_indices = @transform_1, window_bounds = array<i64: 128, 128>}, {transform_indices = @transform_2, window_bounds = array<i64: 128, 128>}, {transform_indices = @transform_3, window_bounds = array<i64: 128, 128>}]} {
    %c0_i32 = arith.constant 0 : i32
    %0 = arith.cmpi eq, %arg1, %c0_i32 : i32
    %1 = arith.extui %0 : i1 to i32
    %c0_i32_0 = arith.constant 0 : i32
    %2 = arith.cmpi ne, %1, %c0_i32_0 : i32
    scf.if %2 {
      %cst_10 = arith.constant 0.000000e+00 : f32
      %12 = vector.broadcast %cst_10 : f32 to vector<128x128xf32>
      %c0_11 = arith.constant 0 : index
      %c0_12 = arith.constant 0 : index
      %13 = vector.load %arg6[%c0_11, %c0_12] : memref<128x128xf32, #tpu.memory_space<vmem>>, vector<128x128xf32>
      tpu.vector_store %arg6[%c0_11, %c0_12], %12 {strides = array<i32>} : memref<128x128xf32, #tpu.memory_space<vmem>>, vector<128x128xf32>,
    } else {
    }
    %c0 = arith.constant 0 : index
    %c0_1 = arith.constant 0 : index
    %3 = vector.load %arg6[%c0, %c0_1] : memref<128x128xf32, #tpu.memory_space<vmem>>, vector<128x128xf32>
    %c0_2 = arith.constant 0 : index
    %c0_3 = arith.constant 0 : index
    %4 = vector.load %arg2[%c0_2, %c0_3] : memref<128x128xbf16, #tpu.memory_space<vmem>>, vector<128x128xbf16>
    %c0_4 = arith.constant 0 : index
    %c0_5 = arith.constant 0 : index
    %5 = vector.load %arg3[%c0_4, %c0_5] : memref<128x128xbf16, #tpu.memory_space<vmem>>, vector<128x128xbf16>
    %cst = arith.constant dense<0.000000e+00> : vector<128x128xf32>
    %6 = tpu.matmul %4, %5, %cst {dimension_numbers = #tpu.dot_dimension_numbers<[1], [0], [0], [1], [0, 0, 1, 1], [], []>} : vector<128x128xbf16>, vector<128x128xbf16>, vector<128x128xf32> -> vector<128x128xf32>
    %7 = arith.addf %3, %6 : vector<128x128xf32>
    %c0_6 = arith.constant 0 : index
    %c0_7 = arith.constant 0 : index
    %8 = vector.load %arg6[%c0_6, %c0_7] : memref<128x128xf32, #tpu.memory_space<vmem>>, vector<128x128xf32>
    tpu.vector_store %arg6[%c0_6, %c0_7], %7 {strides = array<i32>} : memref<128x128xf32, #tpu.memory_space<vmem>>, vector<128x128xf32>,
    %c0_i32_8 = arith.constant 0 : i32
    %9 = arith.cmpi eq, %arg1, %c0_i32_8 : i32
    %10 = arith.extui %9 : i1 to i32
    %c0_i32_9 = arith.constant 0 : i32
    %11 = arith.cmpi ne, %10, %c0_i32_9 : i32
    scf.if %11 {
      %c0_10 = arith.constant 0 : index
      %c0_11 = arith.constant 0 : index
      %12 = vector.load %arg6[%c0_10, %c0_11] : memref<128x128xf32, #tpu.memory_space<vmem>>, vector<128x128xf32>
      %c0_12 = arith.constant 0 : index
      %c0_13 = arith.constant 0 : index
      %13 = vector.load %arg4[%c0_12, %c0_13] : memref<128x128xf32, #tpu.memory_space<vmem>>, vector<128x128xf32>
      %14 = arith.addf %12, %13 : vector<128x128xf32>
      %c0_14 = arith.constant 0 : index
      %c0_15 = arith.constant 0 : index
      %15 = vector.load %arg5[%c0_14, %c0_15] : memref<128x128xf32, #tpu.memory_space<vmem>>, vector<128x128xf32>
      tpu.vector_store %arg5[%c0_14, %c0_15], %14 {strides = array<i32>} : memref<128x128xf32, #tpu.memory_space<vmem>>, vector<128x128xf32>,
    } else {
    }
    return
  }
  func.func @transform_0(%arg0: i32, %arg1: i32) -> (i32, i32) {
    %c0_i32 = arith.constant 0 : i32
    return %arg0, %arg1 : i32, i32
  }
  func.func @transform_1(%arg0: i32, %arg1: i32) -> (i32, i32) {
    %c0_i32 = arith.constant 0 : i32
    %c0_i32_0 = arith.constant 0 : i32
    return %arg1, %c0_i32 : i32, i32
  }
  func.func @transform_2(%arg0: i32, %arg1: i32) -> (i32, i32) {
    %c0_i32 = arith.constant 0 : i32
    %c0_i32_0 = arith.constant 0 : i32
    return %arg0, %c0_i32 : i32, i32
  }
  func.func @transform_3(%arg0: i32, %arg1: i32) -> (i32, i32) {
    %c0_i32 = arith.constant 0 : i32
    %c0_i32_0 = arith.constant 0 : i32
    return %arg0, %c0_i32 : i32, i32
  }
}

</mosaic_0001>

<llo_original>
// kernel: gnn_encoder.7
$region0: #{gnn_encoder.7}
  #allocation0 [shape = 'u32[]', space=smem, size = 0x4, offset = 0x4, fixed_abs, tag = 'smem constant byte address 0x4 - core index']
  #allocation1 [shape = 'u32[144,128]{1,0:T(1,128)}', space=vmem, size = 0x12000, scoped, tag = 'internal scratch']
  #allocation2 [shape = 'f32[128,128]{1,0:T(8,128)}', space=vmem, size = 0x10000, scoped, tag = 'scratch operand']
  %s0 = inlined_call_operand.vmem [shape: bf16[128,128], index: 0, kind: input, shape index: {}]
  %s1 = inlined_call_operand.vmem [shape: bf16[128,128], index: 1, kind: input, shape index: {}]
  %s2 = inlined_call_operand.vmem [shape: f32[128,128], index: 2, kind: input, shape index: {}]
  %s3 = inlined_call_operand.vmem [shape: f32[128,128], index: 3, kind: output, shape index: {}]
  %s4 = sld [smem:[#allocation0]]
  $region30: #{gnn_encoder.7} parent=0
    _
  %s6 = ssub.s32 1, %s4
  %s7 = scalar_select 0, %s6, %s4
  // Predicated region
  $region2: #{gnn_encoder.7} parent=0 // pred_check
    _
  $region3: #{gnn_encoder.7} parent=0 // pred_check_branch
    %9 = sbr.rel (0) target = $region5
  $region4: #{gnn_encoder.7} parent=0 // pred_region
    _
  $region5: #{gnn_encoder.7} parent=0 // pred_fallthru
    _
  // Predicated region
  $region6: #{gnn_encoder.7} parent=0 // pred_check
    _
  $region7: #{gnn_encoder.7} parent=0 // pred_check_branch
    %11 = sbr.rel (0) target = $region9
  $region8: #{gnn_encoder.7} parent=0 // pred_region
    _
  $region9: #{gnn_encoder.7} parent=0 // pred_fallthru
    _
  // Predicated region
  $region10: #{gnn_encoder.7} parent=0 // pred_check
    _
  $region11: #{gnn_encoder.7} parent=0 // pred_check_branch
    %13 = sbr.rel (0) target = $region13
  $region12: #{gnn_encoder.7} parent=0 // pred_region
    _
  $region13: #{gnn_encoder.7} parent=0 // pred_fallthru
    _
  %p15 = scmp.eq.s32.totalorder 0, 0
  // Predicated region
  $region14: #{gnn_encoder.7} parent=0 // pred_check
    %p16 = pneg %p15
  $region15: #{gnn_encoder.7} parent=0 // pred_check_branch
    %18 = sbr.rel (%p16) target = $region17
  $region16: #{gnn_encoder.7} parent=0 // pred_region
    %19 = vst [vmem:[#allocation2] sm:$0xff] 0.0
    %20 = vst [vmem:[#allocation2 + $0x8] sm:$0xff] 0.0
    %21 = vst [vmem:[#allocation2 + $0x10] sm:$0xff] 0.0
    %22 = vst [vmem:[#allocation2 + $0x18] sm:$0xff] 0.0
    %23 = vst [vmem:[#allocation2 + $0x20] sm:$0xff] 0.0
    %24 = vst [vmem:[#allocation2 + $0x28] sm:$0xff] 0.0
    %25 = vst [vmem:[#allocation2 + $0x30] sm:$0xff] 0.0
    %26 = vst [vmem:[#allocation2 + $0x38] sm:$0xff] 0.0
    %27 = vst [vmem:[#allocation2 + $0x40] sm:$0xff] 0.0
    %28 = vst [vmem:[#allocation2 + $0x48] sm:$0xff] 0.0
    %29 = vst [vmem:[#allocation2 + $0x50] sm:$0xff] 0.0
    %30 = vst [vmem:[#allocation2 + $0x58] sm:$0xff] 0.0
    %31 = vst [vmem:[#allocation2 + $0x60] sm:$0xff] 0.0
    %32 = vst [vmem:[#allocation2 + $0x68] sm:$0xff] 0.0
    %33 = vst [vmem:[#allocation2 + $0x70] sm:$0xff] 0.0
    %34 = vst [vmem:[#allocation2 + $0x78] sm:$0xff] 0.0
  $region17: #{gnn_encoder.7} parent=0 // pred_fallthru
    _
  %v35 = vld [vmem:[#allocation2] sm:$0xff]
  %v36 = vld [vmem:[#allocation2 + $0x8] sm:$0xff]
  %v37 = vld [vmem:[#allocation2 + $0x10] sm:$0xff]
  %v38 = vld [vmem:[#allocation2 + $0x18] sm:$0xff]
  %v39 = vld [vmem:[#allocation2 + $0x20] sm:$0xff]
  %v40 = vld [vmem:[#allocation2 + $0x28] sm:$0xff]
  %v41 = vld [vmem:[#allocation2 + $0x30] sm:$0xff]
  %v42 = vld [vmem:[#allocation2 + $0x38] sm:$0xff]
  %v43 = vld [vmem:[#allocation2 + $0x40] sm:$0xff]
  %v44 = vld [vmem:[#allocation2 + $0x48] sm:$0xff]
  %v45 = vld [vmem:[#allocation2 + $0x50] sm:$0xff]
  %v46 = vld [vmem:[#allocation2 + $0x58] sm:$0xff]
  %v47 = vld [vmem:[#allocation2 + $0x60] sm:$0xff]
  %v48 = vld [vmem:[#allocation2 + $0x68] sm:$0xff]
  %v49 = vld [vmem:[#allocation2 + $0x70] sm:$0xff]
  %v50 = vld [vmem:[#allocation2 + $0x78] sm:$0xff]
  %v51 = vld [vmem:[%s0] sm:$0xf]
  %v52 = vld [vmem:[%s0 + $0x4] sm:$0xf]
  %v53 = vld [vmem:[%s0 + $0x8] sm:$0xf]
  %v54 = vld [vmem:[%s0 + $0xc] sm:$0xf]
  %v55 = vld [vmem:[%s0 + $0x10] sm:$0xf]
  %v56 = vld [vmem:[%s0 + $0x14] sm:$0xf]
  %v57 = vld [vmem:[%s0 + $0x18] sm:$0xf]
  %v58 = vld [vmem:[%s0 + $0x1c] sm:$0xf]
  %v59 = vld [vmem:[%s0 + $0x20] sm:$0xf]
  %v60 = vld [vmem:[%s0 + $0x24] sm:$0xf]
  %v61 = vld [vmem:[%s0 + $0x28] sm:$0xf]
  %v62 = vld [vmem:[%s0 + $0x2c] sm:$0xf]
  %v63 = vld [vmem:[%s0 + $0x30] sm:$0xf]
  %v64 = vld [vmem:[%s0 + $0x34] sm:$0xf]
  %v65 = vld [vmem:[%s0 + $0x38] sm:$0xf]
  %v66 = vld [vmem:[%s0 + $0x3c] sm:$0xf]
  %v67 = vld [vmem:[%s1] sm:$0xf]
  %v68 = vld [vmem:[%s1 + $0x4] sm:$0xf]
  %v69 = vld [vmem:[%s1 + $0x8] sm:$0xf]
  %v70 = vld [vmem:[%s1 + $0xc] sm:$0xf]
  %v71 = vld [vmem:[%s1 + $0x10] sm:$0xf]
  %v72 = vld [vmem:[%s1 + $0x14] sm:$0xf]
  %v73 = vld [vmem:[%s1 + $0x18] sm:$0xf]
  %v74 = vld [vmem:[%s1 + $0x1c] sm:$0xf]
  %v75 = vld [vmem:[%s1 + $0x20] sm:$0xf]
  %v76 = vld [vmem:[%s1 + $0x24] sm:$0xf]
  %v77 = vld [vmem:[%s1 + $0x28] sm:$0xf]
  %v78 = vld [vmem:[%s1 + $0x2c] sm:$0xf]
  %v79 = vld [vmem:[%s1 + $0x30] sm:$0xf]
  %v80 = vld [vmem:[%s1 + $0x34] sm:$0xf]
  %v81 = vld [vmem:[%s1 + $0x38] sm:$0xf]
  %v82 = vld [vmem:[%s1 + $0x3c] sm:$0xf]
  %v99 = vunpack.c.l.b16 %v51
  %v100 = vunpack.c.l.b16 %v52
  %v101 = vunpack.c.l.b16 %v53
  %v102 = vunpack.c.l.b16 %v54
  %v103 = vunpack.c.l.b16 %v55
  %v104 = vunpack.c.l.b16 %v56
  %v105 = vunpack.c.l.b16 %v57
  %v106 = vunpack.c.l.b16 %v58
  %v107 = vunpack.c.l.b16 %v59
  %v108 = vunpack.c.l.b16 %v60
  %v109 = vunpack.c.l.b16 %v61
  %v110 = vunpack.c.l.b16 %v62
  %v111 = vunpack.c.l.b16 %v63
  %v112 = vunpack.c.l.b16 %v64
  %v113 = vunpack.c.l.b16 %v65
  %v114 = vunpack.c.l.b16 %v66
  %v115 = vpack.c.b16 %v100, %v99
  %v116 = vpack.c.b16 %v102, %v101
  %v117 = vpack.c.b16 %v104, %v103
  %v118 = vpack.c.b16 %v106, %v105
  %v119 = vpack.c.b16 %v108, %v107
  %v120 = vpack.c.b16 %v110, %v109
  %v121 = vpack.c.b16 %v112, %v111
  %v122 = vpack.c.b16 %v114, %v113
  %v147 = vunpack.c.l.b16 %v67
  %v148 = vunpack.c.l.b16 %v68
  %v149 = vunpack.c.l.b16 %v69
  %v150 = vunpack.c.l.b16 %v70
  %v151 = vunpack.c.l.b16 %v71
  %v152 = vunpack.c.l.b16 %v72
  %v153 = vunpack.c.l.b16 %v73
  %v154 = vunpack.c.l.b16 %v74
  %v155 = vunpack.c.l.b16 %v75
  %v156 = vunpack.c.l.b16 %v76
  %v157 = vunpack.c.l.b16 %v77
  %v158 = vunpack.c.l.b16 %v78
  %v159 = vunpack.c.l.b16 %v79
  %v160 = vunpack.c.l.b16 %v80
  %v161 = vunpack.c.l.b16 %v81
  %v162 = vunpack.c.l.b16 %v82
  %v163 = vpack.c.b16 %v148, %v147
  %v164 = vpack.c.b16 %v150, %v149
  %v165 = vpack.c.b16 %v152, %v151
  %v166 = vpack.c.b16 %v154, %v153
  %v167 = vpack.c.b16 %v156, %v155
  %v168 = vpack.c.b16 %v158, %v157
  %v169 = vpack.c.b16 %v160, %v159
  %v170 = vpack.c.b16 %v162, %v161
  %179 = vmatprep.subr.bf16.mxu0 0
  %180 = vmatpush1.bf16.msra.mxu0 %v170
  %181 = vmatprep.subr.bf16.mxu0 0
  %182 = vmatpush1.bf16.msra.mxu0 %v169
  %183 = vmatprep.subr.bf16.mxu0 0
  %184 = vmatpush1.bf16.msra.mxu0 %v168
  %185 = vmatprep.subr.bf16.mxu0 0
  %186 = vmatpush1.bf16.msra.mxu0 %v167
  %187 = vmatprep.subr.bf16.mxu0 0
  %188 = vmatpush1.bf16.msra.mxu0 %v166
  %189 = vmatprep.subr.bf16.mxu0 0
  %190 = vmatpush1.bf16.msra.mxu0 %v165
  %191 = vmatprep.subr.bf16.mxu0 0
  %192 = vmatpush1.bf16.msra.mxu0 %v164
  %193 = vmatprep.subr.bf16.mxu0 0
  %194 = vmatpush1.bf16.msra.mxu0 %v163
  %195 = vmatprep.subr.bf16.mxu0 0
  %196 = vmatpush2.bf16.msra.mxu0 0
  %197 = vmatprep.subr.bf16.mxu0 0
  %198 = vmatpush2.bf16.msra.mxu0 0
  %199 = vmatprep.subr.bf16.mxu0 0
  %200 = vmatpush2.bf16.msra.mxu0 0
  %201 = vmatprep.subr.bf16.mxu0 0
  %202 = vmatpush2.bf16.msra.mxu0 0
  %203 = vmatprep.subr.bf16.mxu0 0
  %204 = vmatpush2.bf16.msra.mxu0 0
  %205 = vmatprep.subr.bf16.mxu0 0
  %206 = vmatpush2.bf16.msra.mxu0 0
  %207 = vmatprep.subr.bf16.mxu0 0
  %208 = vmatpush2.bf16.msra.mxu0 0
  %209 = vmatprep.subr.bf16.mxu0 0
  %210 = vmatpush2.bf16.msra.mxu0 0
  %211 = vmatprep.mubr.bf16.mxu0 0
  %212 = vmatmul.mubr.bf16.gmra.mxu0 %v115
  %v213 = vpop.f32.mrf.mxu0
  %v214 = vadd.f32 0.0, %v213
  %v215 = vpop.f32.mrf.mxu0
  %v216 = vpop.f32.mrf.mxu0
  %v217 = vadd.f32 0.0, %v216
  %v218 = vpop.f32.mrf.mxu0
  %219 = vmatprep.mubr.bf16.mxu0 0
  %220 = vmatmul.mubr.bf16.gmra.mxu0 %v116
  %v221 = vpop.f32.mrf.mxu0
  %v222 = vadd.f32 0.0, %v221
  %v223 = vpop.f32.mrf.mxu0
  %v224 = vpop.f32.mrf.mxu0
  %v225 = vadd.f32 0.0, %v224
  %v226 = vpop.f32.mrf.mxu0
  %227 = vmatprep.mubr.bf16.mxu0 0
  %228 = vmatmul.mubr.bf16.gmra.mxu0 %v117
  %v229 = vpop.f32.mrf.mxu0
  %v230 = vadd.f32 0.0, %v229
  %v231 = vpop.f32.mrf.mxu0
  %v232 = vpop.f32.mrf.mxu0
  %v233 = vadd.f32 0.0, %v232
  %v234 = vpop.f32.mrf.mxu0
  %235 = vmatprep.mubr.bf16.mxu0 0
  %236 = vmatmul.mubr.bf16.gmra.mxu0 %v118
  %v237 = vpop.f32.mrf.mxu0
  %v238 = vadd.f32 0.0, %v237
  %v239 = vpop.f32.mrf.mxu0
  %v240 = vpop.f32.mrf.mxu0
  %v241 = vadd.f32 0.0, %v240
  %v242 = vpop.f32.mrf.mxu0
  %243 = vmatprep.mubr.bf16.mxu0 0
  %244 = vmatmul.mubr.bf16.gmra.mxu0 %v119
  %v245 = vpop.f32.mrf.mxu0
  %v246 = vadd.f32 0.0, %v245
  %v247 = vpop.f32.mrf.mxu0
  %v248 = vpop.f32.mrf.mxu0
  %v249 = vadd.f32 0.0, %v248
  %v250 = vpop.f32.mrf.mxu0
  %251 = vmatprep.mubr.bf16.mxu0 0
  %252 = vmatmul.mubr.bf16.gmra.mxu0 %v120
  %v253 = vpop.f32.mrf.mxu0
  %v254 = vadd.f32 0.0, %v253
  %v255 = vpop.f32.mrf.mxu0
  %v256 = vpop.f32.mrf.mxu0
  %v257 = vadd.f32 0.0, %v256
  %v258 = vpop.f32.mrf.mxu0
  %259 = vmatprep.mubr.bf16.mxu0 0
  %260 = vmatmul.mubr.bf16.gmra.mxu0 %v121
  %v261 = vpop.f32.mrf.mxu0
  %v262 = vadd.f32 0.0, %v261
  %v263 = vpop.f32.mrf.mxu0
  %v264 = vpop.f32.mrf.mxu0
  %v265 = vadd.f32 0.0, %v264
  %v266 = vpop.f32.mrf.mxu0
  %267 = vmatprep.mubr.bf16.mxu0 0
  %268 = vmatmul.mubr.bf16.gmra.mxu0 %v122
  %v269 = vpop.f32.mrf.mxu0
  %v270 = vadd.f32 0.0, %v269
  %v271 = vpop.f32.mrf.mxu0
  %v272 = vpop.f32.mrf.mxu0
  %v273 = vadd.f32 0.0, %v272
  %v274 = vpop.f32.mrf.mxu0
  %275 = vdwg.mxu0
  %v276 = vadd.f32 %v35, %v214
  %v277 = vadd.f32 %v36, %v217
  %v278 = vadd.f32 %v37, %v222
  %v279 = vadd.f32 %v38, %v225
  %v280 = vadd.f32 %v39, %v230
  %v281 = vadd.f32 %v40, %v233
  %v282 = vadd.f32 %v41, %v238
  %v283 = vadd.f32 %v42, %v241
  %v284 = vadd.f32 %v43, %v246
  %v285 = vadd.f32 %v44, %v249
  %v286 = vadd.f32 %v45, %v254
  %v287 = vadd.f32 %v46, %v257
  %v288 = vadd.f32 %v47, %v262
  %v289 = vadd.f32 %v48, %v265
  %v290 = vadd.f32 %v49, %v270
  %v291 = vadd.f32 %v50, %v273
  %292 = vst [vmem:[#allocation2] sm:$0xff] %v276
  %293 = vst [vmem:[#allocation2 + $0x8] sm:$0xff] %v277
  %294 = vst [vmem:[#allocation2 + $0x10] sm:$0xff] %v278
  %295 = vst [vmem:[#allocation2 + $0x18] sm:$0xff] %v279
  %296 = vst [vmem:[#allocation2 + $0x20] sm:$0xff] %v280
  %297 = vst [vmem:[#allocation2 + $0x28] sm:$0xff] %v281
  %298 = vst [vmem:[#allocation2 + $0x30] sm:$0xff] %v282
  %299 = vst [vmem:[#allocation2 + $0x38] sm:$0xff] %v283
  %300 = vst [vmem:[#allocation2 + $0x40] sm:$0xff] %v284
  %301 = vst [vmem:[#allocation2 + $0x48] sm:$0xff] %v285
  %302 = vst [vmem:[#allocation2 + $0x50] sm:$0xff] %v286
  %303 = vst [vmem:[#allocation2 + $0x58] sm:$0xff] %v287
  %304 = vst [vmem:[#allocation2 + $0x60] sm:$0xff] %v288
  %305 = vst [vmem:[#allocation2 + $0x68] sm:$0xff] %v289
  %306 = vst [vmem:[#allocation2 + $0x70] sm:$0xff] %v290
  %307 = vst [vmem:[#allocation2 + $0x78] sm:$0xff] %v291
  // Predicated region
  $region18: #{gnn_encoder.7} parent=0 // pred_check
    %p308 = pneg %p15
  $region19: #{gnn_encoder.7} parent=0 // pred_check_branch
    %310 = sbr.rel (%p308) target = $region21
  $region20: #{gnn_encoder.7} parent=0 // pred_region
    %v311 = vld [vmem:[#allocation2] sm:$0xff]
    %v312 = vld [vmem:[#allocation2 + $0x8] sm:$0xff]
    %v313 = vld [vmem:[#allocation2 + $0x10] sm:$0xff]
    %v314 = vld [vmem:[#allocation2 + $0x18] sm:$0xff]
    %v315 = vld [vmem:[#allocation2 + $0x20] sm:$0xff]
    %v316 = vld [vmem:[#allocation2 + $0x28] sm:$0xff]
    %v317 = vld [vmem:[#allocation2 + $0x30] sm:$0xff]
    %v318 = vld [vmem:[#allocation2 + $0x38] sm:$0xff]
    %v319 = vld [vmem:[#allocation2 + $0x40] sm:$0xff]
    %v320 = vld [vmem:[#allocation2 + $0x48] sm:$0xff]
    %v321 = vld [vmem:[#allocation2 + $0x50] sm:$0xff]
    %v322 = vld [vmem:[#allocation2 + $0x58] sm:$0xff]
    %v323 = vld [vmem:[#allocation2 + $0x60] sm:$0xff]
    %v324 = vld [vmem:[#allocation2 + $0x68] sm:$0xff]
    %v325 = vld [vmem:[#allocation2 + $0x70] sm:$0xff]
    %v326 = vld [vmem:[#allocation2 + $0x78] sm:$0xff]
    %v327 = vld [vmem:[%s2] sm:$0xff]
    %v328 = vld [vmem:[%s2 + $0x8] sm:$0xff]
    %v329 = vld [vmem:[%s2 + $0x10] sm:$0xff]
    %v330 = vld [vmem:[%s2 + $0x18] sm:$0xff]
    %v331 = vld [vmem:[%s2 + $0x20] sm:$0xff]
    %v332 = vld [vmem:[%s2 + $0x28] sm:$0xff]
    %v333 = vld [vmem:[%s2 + $0x30] sm:$0xff]
    %v334 = vld [vmem:[%s2 + $0x38] sm:$0xff]
    %v335 = vld [vmem:[%s2 + $0x40] sm:$0xff]
    %v336 = vld [vmem:[%s2 + $0x48] sm:$0xff]
    %v337 = vld [vmem:[%s2 + $0x50] sm:$0xff]
    %v338 = vld [vmem:[%s2 + $0x58] sm:$0xff]
    %v339 = vld [vmem:[%s2 + $0x60] sm:$0xff]
    %v340 = vld [vmem:[%s2 + $0x68] sm:$0xff]
    %v341 = vld [vmem:[%s2 + $0x70] sm:$0xff]
    %v342 = vld [vmem:[%s2 + $0x78] sm:$0xff]
    %v343 = vadd.f32 %v311, %v327
    %v344 = vadd.f32 %v312, %v328
    %v345 = vadd.f32 %v313, %v329
    %v346 = vadd.f32 %v314, %v330
    %v347 = vadd.f32 %v315, %v331
    %v348 = vadd.f32 %v316, %v332
    %v349 = vadd.f32 %v317, %v333
    %v350 = vadd.f32 %v318, %v334
    %v351 = vadd.f32 %v319, %v335
    %v352 = vadd.f32 %v320, %v336
    %v353 = vadd.f32 %v321, %v337
    %v354 = vadd.f32 %v322, %v338
    %v355 = vadd.f32 %v323, %v339
    %v356 = vadd.f32 %v324, %v340
    %v357 = vadd.f32 %v325, %v341
    %v358 = vadd.f32 %v326, %v342
    %359 = vst [vmem:[%s3] sm:$0xff] %v343
    %360 = vst [vmem:[%s3 + $0x8] sm:$0xff] %v344
    %361 = vst [vmem:[%s3 + $0x10] sm:$0xff] %v345
    %362 = vst [vmem:[%s3 + $0x18] sm:$0xff] %v346
    %363 = vst [vmem:[%s3 + $0x20] sm:$0xff] %v347
    %364 = vst [vmem:[%s3 + $0x28] sm:$0xff] %v348
    %365 = vst [vmem:[%s3 + $0x30] sm:$0xff] %v349
    %366 = vst [vmem:[%s3 + $0x38] sm:$0xff] %v350
    %367 = vst [vmem:[%s3 + $0x40] sm:$0xff] %v351
    %368 = vst [vmem:[%s3 + $0x48] sm:$0xff] %v352
    %369 = vst [vmem:[%s3 + $0x50] sm:$0xff] %v353
    %370 = vst [vmem:[%s3 + $0x58] sm:$0xff] %v354
    %371 = vst [vmem:[%s3 + $0x60] sm:$0xff] %v355
    %372 = vst [vmem:[%s3 + $0x68] sm:$0xff] %v356
    %373 = vst [vmem:[%s3 + $0x70] sm:$0xff] %v357
    %374 = vst [vmem:[%s3 + $0x78] sm:$0xff] %v358
  $region21: #{gnn_encoder.7} parent=0 // pred_fallthru
    _
  // Predicated region
  $region22: #{gnn_encoder.7} parent=0 // pred_check
    _
  $region23: #{gnn_encoder.7} parent=0 // pred_check_branch
    %376 = sbr.rel (0) target = $region25
  $region24: #{gnn_encoder.7} parent=0 // pred_region
    _
  $region25: #{gnn_encoder.7} parent=0 // pred_fallthru
    _
  // Predicated region
  $region26: #{gnn_encoder.7} parent=0 // pred_check
    _
  $region27: #{gnn_encoder.7} parent=0 // pred_check_branch
    %378 = sbr.rel (0) target = $region29
  $region28: #{gnn_encoder.7} parent=0 // pred_region
    _
  $region29: #{gnn_encoder.7} parent=0 // pred_fallthru
    _

// kernel: gnn_encoder.4
$region0: #{gnn_encoder.4}
  #allocation0 [shape = 'u32[]', space=smem, size = 0x4, offset = 0x4, fixed_abs, tag = 'smem constant byte address 0x4 - core index']
  #allocation1 [shape = 'u32[144,128]{1,0:T(1,128)}', space=vmem, size = 0x12000, scoped, tag = 'internal scratch']
  %s0 = inlined_call_operand.vmem [shape: bf16[128,128], index: 0, kind: input, shape index: {}]
  %s1 = inlined_call_operand.vmem [shape: bf16[128,128], index: 1, kind: input, shape index: {}]
  %s2 = inlined_call_operand.vmem [shape: bf16[128,128], index: 2, kind: input, shape index: {}]
  %s3 = inlined_call_operand.vmem [shape: f32[1,128], index: 3, kind: input, shape index: {}]
  %s4 = inlined_call_operand.vmem [shape: bf16[128,128], index: 4, kind: output, shape index: {0}]
  %s5 = inlined_call_operand.vmem [shape: f32[128,128], index: 5, kind: output, shape index: {1}]
  %6 = xla_tuple %s4, %s5
  %s7 = sld [smem:[#allocation0]]
  $region34: #{gnn_encoder.4} parent=0
    _
  %s9 = ssub.s32 1, %s7
  %s10 = scalar_select 0, %s9, %s7
  // Predicated region
  $region2: #{gnn_encoder.4} parent=0 // pred_check
    _
  $region3: #{gnn_encoder.4} parent=0 // pred_check_branch
    %12 = sbr.rel (0) target = $region5
  $region4: #{gnn_encoder.4} parent=0 // pred_region
    _
  $region5: #{gnn_encoder.4} parent=0 // pred_fallthru
    _
  // Predicated region
  $region6: #{gnn_encoder.4} parent=0 // pred_check
    _
  $region7: #{gnn_encoder.4} parent=0 // pred_check_branch
    %14 = sbr.rel (0) target = $region9
  $region8: #{gnn_encoder.4} parent=0 // pred_region
    _
  $region9: #{gnn_encoder.4} parent=0 // pred_fallthru
    _
  // Predicated region
  $region10: #{gnn_encoder.4} parent=0 // pred_check
    _
  $region11: #{gnn_encoder.4} parent=0 // pred_check_branch
    %16 = sbr.rel (0) target = $region13
  $region12: #{gnn_encoder.4} parent=0 // pred_region
    _
  $region13: #{gnn_encoder.4} parent=0 // pred_fallthru
    _
  // Predicated region
  $region14: #{gnn_encoder.4} parent=0 // pred_check
    _
  $region15: #{gnn_encoder.4} parent=0 // pred_check_branch
    %18 = sbr.rel (0) target = $region17
  $region16: #{gnn_encoder.4} parent=0 // pred_region
    _
  $region17: #{gnn_encoder.4} parent=0 // pred_fallthru
    _
  %v20 = vld [vmem:[%s0] sm:$0xf]
  %v21 = vld [vmem:[%s0 + $0x4] sm:$0xf]
  %v22 = vld [vmem:[%s0 + $0x8] sm:$0xf]
  %v23 = vld [vmem:[%s0 + $0xc] sm:$0xf]
  %v24 = vld [vmem:[%s0 + $0x10] sm:$0xf]
  %v25 = vld [vmem:[%s0 + $0x14] sm:$0xf]
  %v26 = vld [vmem:[%s0 + $0x18] sm:$0xf]
  %v27 = vld [vmem:[%s0 + $0x1c] sm:$0xf]
  %v28 = vld [vmem:[%s0 + $0x20] sm:$0xf]
  %v29 = vld [vmem:[%s0 + $0x24] sm:$0xf]
  %v30 = vld [vmem:[%s0 + $0x28] sm:$0xf]
  %v31 = vld [vmem:[%s0 + $0x2c] sm:$0xf]
  %v32 = vld [vmem:[%s0 + $0x30] sm:$0xf]
  %v33 = vld [vmem:[%s0 + $0x34] sm:$0xf]
  %v34 = vld [vmem:[%s0 + $0x38] sm:$0xf]
  %v35 = vld [vmem:[%s0 + $0x3c] sm:$0xf]
  %v36 = vld [vmem:[%s1] sm:$0xf]
  %v37 = vld [vmem:[%s1 + $0x4] sm:$0xf]
  %v38 = vld [vmem:[%s1 + $0x8] sm:$0xf]
  %v39 = vld [vmem:[%s1 + $0xc] sm:$0xf]
  %v40 = vld [vmem:[%s1 + $0x10] sm:$0xf]
  %v41 = vld [vmem:[%s1 + $0x14] sm:$0xf]
  %v42 = vld [vmem:[%s1 + $0x18] sm:$0xf]
  %v43 = vld [vmem:[%s1 + $0x1c] sm:$0xf]
  %v44 = vld [vmem:[%s1 + $0x20] sm:$0xf]
  %v45 = vld [vmem:[%s1 + $0x24] sm:$0xf]
  %v46 = vld [vmem:[%s1 + $0x28] sm:$0xf]
  %v47 = vld [vmem:[%s1 + $0x2c] sm:$0xf]
  %v48 = vld [vmem:[%s1 + $0x30] sm:$0xf]
  %v49 = vld [vmem:[%s1 + $0x34] sm:$0xf]
  %v50 = vld [vmem:[%s1 + $0x38] sm:$0xf]
  %v51 = vld [vmem:[%s1 + $0x3c] sm:$0xf]
  %v68 = vunpack.c.l.b16 %v20
  %v69 = vunpack.c.l.b16 %v21
  %v70 = vunpack.c.l.b16 %v22
  %v71 = vunpack.c.l.b16 %v23
  %v72 = vunpack.c.l.b16 %v24
  %v73 = vunpack.c.l.b16 %v25
  %v74 = vunpack.c.l.b16 %v26
  %v75 = vunpack.c.l.b16 %v27
  %v76 = vunpack.c.l.b16 %v28
  %v77 = vunpack.c.l.b16 %v29
  %v78 = vunpack.c.l.b16 %v30
  %v79 = vunpack.c.l.b16 %v31
  %v80 = vunpack.c.l.b16 %v32
  %v81 = vunpack.c.l.b16 %v33
  %v82 = vunpack.c.l.b16 %v34
  %v83 = vunpack.c.l.b16 %v35
  %v84 = vpack.c.b16 %v69, %v68
  %v85 = vpack.c.b16 %v71, %v70
  %v86 = vpack.c.b16 %v73, %v72
  %v87 = vpack.c.b16 %v75, %v74
  %v88 = vpack.c.b16 %v77, %v76
  %v89 = vpack.c.b16 %v79, %v78
  %v90 = vpack.c.b16 %v81, %v80
  %v91 = vpack.c.b16 %v83, %v82
  %v116 = vunpack.c.l.b16 %v36
  %v117 = vunpack.c.l.b16 %v37
  %v118 = vunpack.c.l.b16 %v38
  %v119 = vunpack.c.l.b16 %v39
  %v120 = vunpack.c.l.b16 %v40
  %v121 = vunpack.c.l.b16 %v41
  %v122 = vunpack.c.l.b16 %v42
  %v123 = vunpack.c.l.b16 %v43
  %v124 = vunpack.c.l.b16 %v44
  %v125 = vunpack.c.l.b16 %v45
  %v126 = vunpack.c.l.b16 %v46
  %v127 = vunpack.c.l.b16 %v47
  %v128 = vunpack.c.l.b16 %v48
  %v129 = vunpack.c.l.b16 %v49
  %v130 = vunpack.c.l.b16 %v50
  %v131 = vunpack.c.l.b16 %v51
  %v132 = vpack.c.b16 %v117, %v116
  %v133 = vpack.c.b16 %v119, %v118
  %v134 = vpack.c.b16 %v121, %v120
  %v135 = vpack.c.b16 %v123, %v122
  %v136 = vpack.c.b16 %v125, %v124
  %v137 = vpack.c.b16 %v127, %v126
  %v138 = vpack.c.b16 %v129, %v128
  %v139 = vpack.c.b16 %v131, %v130
  %148 = vmatprep.subr.bf16.mxu0 0
  %149 = vmatpush1.bf16.msra.mxu0 %v139
  %150 = vmatprep.subr.bf16.mxu0 0
  %151 = vmatpush1.bf16.msra.mxu0 %v138
  %152 = vmatprep.subr.bf16.mxu0 0
  %153 = vmatpush1.bf16.msra.mxu0 %v137
  %154 = vmatprep.subr.bf16.mxu0 0
  %155 = vmatpush1.bf16.msra.mxu0 %v136
  %156 = vmatprep.subr.bf16.mxu0 0
  %157 = vmatpush1.bf16.msra.mxu0 %v135
  %158 = vmatprep.subr.bf16.mxu0 0
  %159 = vmatpush1.bf16.msra.mxu0 %v134
  %160 = vmatprep.subr.bf16.mxu0 0
  %161 = vmatpush1.bf16.msra.mxu0 %v133
  %162 = vmatprep.subr.bf16.mxu0 0
  %163 = vmatpush1.bf16.msra.mxu0 %v132
  %164 = vmatprep.subr.bf16.mxu0 0
  %165 = vmatpush2.bf16.msra.mxu0 0
  %166 = vmatprep.subr.bf16.mxu0 0
  %167 = vmatpush2.bf16.msra.mxu0 0
  %168 = vmatprep.subr.bf16.mxu0 0
  %169 = vmatpush2.bf16.msra.mxu0 0
  %170 = vmatprep.subr.bf16.mxu0 0
  %171 = vmatpush2.bf16.msra.mxu0 0
  %172 = vmatprep.subr.bf16.mxu0 0
  %173 = vmatpush2.bf16.msra.mxu0 0
  %174 = vmatprep.subr.bf16.mxu0 0
  %175 = vmatpush2.bf16.msra.mxu0 0
  %176 = vmatprep.subr.bf16.mxu0 0
  %177 = vmatpush2.bf16.msra.mxu0 0
  %178 = vmatprep.subr.bf16.mxu0 0
  %179 = vmatpush2.bf16.msra.mxu0 0
  %180 = vmatprep.mubr.bf16.mxu0 0
  %181 = vmatmul.mubr.bf16.gmra.mxu0 %v84
  %v182 = vpop.f32.mrf.mxu0
  %v183 = vadd.f32 0.0, %v182
  %v184 = vpop.f32.mrf.mxu0
  %v185 = vpop.f32.mrf.mxu0
  %v186 = vadd.f32 0.0, %v185
  %v187 = vpop.f32.mrf.mxu0
  %188 = vmatprep.mubr.bf16.mxu0 0
  %189 = vmatmul.mubr.bf16.gmra.mxu0 %v85
  %v190 = vpop.f32.mrf.mxu0
  %v191 = vadd.f32 0.0, %v190
  %v192 = vpop.f32.mrf.mxu0
  %v193 = vpop.f32.mrf.mxu0
  %v194 = vadd.f32 0.0, %v193
  %v195 = vpop.f32.mrf.mxu0
  %196 = vmatprep.mubr.bf16.mxu0 0
  %197 = vmatmul.mubr.bf16.gmra.mxu0 %v86
  %v198 = vpop.f32.mrf.mxu0
  %v199 = vadd.f32 0.0, %v198
  %v200 = vpop.f32.mrf.mxu0
  %v201 = vpop.f32.mrf.mxu0
  %v202 = vadd.f32 0.0, %v201
  %v203 = vpop.f32.mrf.mxu0
  %204 = vmatprep.mubr.bf16.mxu0 0
  %205 = vmatmul.mubr.bf16.gmra.mxu0 %v87
  %v206 = vpop.f32.mrf.mxu0
  %v207 = vadd.f32 0.0, %v206
  %v208 = vpop.f32.mrf.mxu0
  %v209 = vpop.f32.mrf.mxu0
  %v210 = vadd.f32 0.0, %v209
  %v211 = vpop.f32.mrf.mxu0
  %212 = vmatprep.mubr.bf16.mxu0 0
  %213 = vmatmul.mubr.bf16.gmra.mxu0 %v88
  %v214 = vpop.f32.mrf.mxu0
  %v215 = vadd.f32 0.0, %v214
  %v216 = vpop.f32.mrf.mxu0
  %v217 = vpop.f32.mrf.mxu0
  %v218 = vadd.f32 0.0, %v217
  %v219 = vpop.f32.mrf.mxu0
  %220 = vmatprep.mubr.bf16.mxu0 0
  %221 = vmatmul.mubr.bf16.gmra.mxu0 %v89
  %v222 = vpop.f32.mrf.mxu0
  %v223 = vadd.f32 0.0, %v222
  %v224 = vpop.f32.mrf.mxu0
  %v225 = vpop.f32.mrf.mxu0
  %v226 = vadd.f32 0.0, %v225
  %v227 = vpop.f32.mrf.mxu0
  %228 = vmatprep.mubr.bf16.mxu0 0
  %229 = vmatmul.mubr.bf16.gmra.mxu0 %v90
  %v230 = vpop.f32.mrf.mxu0
  %v231 = vadd.f32 0.0, %v230
  %v232 = vpop.f32.mrf.mxu0
  %v233 = vpop.f32.mrf.mxu0
  %v234 = vadd.f32 0.0, %v233
  %v235 = vpop.f32.mrf.mxu0
  %236 = vmatprep.mubr.bf16.mxu0 0
  %237 = vmatmul.mubr.bf16.gmra.mxu0 %v91
  %v238 = vpop.f32.mrf.mxu0
  %v239 = vadd.f32 0.0, %v238
  %v240 = vpop.f32.mrf.mxu0
  %v241 = vpop.f32.mrf.mxu0
  %v242 = vadd.f32 0.0, %v241
  %v243 = vpop.f32.mrf.mxu0
  %244 = vdwg.mxu0
  %v245 = vld [vmem:[%s2] sm:$0xf]
  %v246 = vld [vmem:[%s2 + $0x4] sm:$0xf]
  %v247 = vld [vmem:[%s2 + $0x8] sm:$0xf]
  %v248 = vld [vmem:[%s2 + $0xc] sm:$0xf]
  %v249 = vld [vmem:[%s2 + $0x10] sm:$0xf]
  %v250 = vld [vmem:[%s2 + $0x14] sm:$0xf]
  %v251 = vld [vmem:[%s2 + $0x18] sm:$0xf]
  %v252 = vld [vmem:[%s2 + $0x1c] sm:$0xf]
  %v253 = vld [vmem:[%s2 + $0x20] sm:$0xf]
  %v254 = vld [vmem:[%s2 + $0x24] sm:$0xf]
  %v255 = vld [vmem:[%s2 + $0x28] sm:$0xf]
  %v256 = vld [vmem:[%s2 + $0x2c] sm:$0xf]
  %v257 = vld [vmem:[%s2 + $0x30] sm:$0xf]
  %v258 = vld [vmem:[%s2 + $0x34] sm:$0xf]
  %v259 = vld [vmem:[%s2 + $0x38] sm:$0xf]
  %v260 = vld [vmem:[%s2 + $0x3c] sm:$0xf]
  %v261 = vld [vmem:[%s3] sm:$0x1]
  %v263 = vlaneseq
  %v264 = vshrl.u32 %v263, 7
  %v265 = vsub.s32 0, %v264
  %v266 = vrot.slane %v261, %v265
  %v284 = vunpack.c.l.b16 %v245
  %v285 = vunpack.c.l.b16 %v246
  %v286 = vunpack.c.l.b16 %v247
  %v287 = vunpack.c.l.b16 %v248
  %v288 = vunpack.c.l.b16 %v249
  %v289 = vunpack.c.l.b16 %v250
  %v290 = vunpack.c.l.b16 %v251
  %v291 = vunpack.c.l.b16 %v252
  %v292 = vunpack.c.l.b16 %v253
  %v293 = vunpack.c.l.b16 %v254
  %v294 = vunpack.c.l.b16 %v255
  %v295 = vunpack.c.l.b16 %v256
  %v296 = vunpack.c.l.b16 %v257
  %v297 = vunpack.c.l.b16 %v258
  %v298 = vunpack.c.l.b16 %v259
  %v299 = vunpack.c.l.b16 %v260
  %v300 = vpack.c.b16 %v285, %v284
  %v301 = vpack.c.b16 %v287, %v286
  %v302 = vpack.c.b16 %v289, %v288
  %v303 = vpack.c.b16 %v291, %v290
  %v304 = vpack.c.b16 %v293, %v292
  %v305 = vpack.c.b16 %v295, %v294
  %v306 = vpack.c.b16 %v297, %v296
  %v307 = vpack.c.b16 %v299, %v298
  %316 = vmatprep.subr.bf16.mxu0 0
  %317 = vmatpush1.bf16.msra.mxu0 %v307
  %318 = vmatprep.subr.bf16.mxu0 0
  %319 = vmatpush1.bf16.msra.mxu0 %v306
  %320 = vmatprep.subr.bf16.mxu0 0
  %321 = vmatpush1.bf16.msra.mxu0 %v305
  %322 = vmatprep.subr.bf16.mxu0 0
  %323 = vmatpush1.bf16.msra.mxu0 %v304
  %324 = vmatprep.subr.bf16.mxu0 0
  %325 = vmatpush1.bf16.msra.mxu0 %v303
  %326 = vmatprep.subr.bf16.mxu0 0
  %327 = vmatpush1.bf16.msra.mxu0 %v302
  %328 = vmatprep.subr.bf16.mxu0 0
  %329 = vmatpush1.bf16.msra.mxu0 %v301
  %330 = vmatprep.subr.bf16.mxu0 0
  %331 = vmatpush1.bf16.msra.mxu0 %v300
  %332 = vmatprep.subr.bf16.mxu0 0
  %333 = vmatpush2.bf16.msra.mxu0 0
  %334 = vmatprep.subr.bf16.mxu0 0
  %335 = vmatpush2.bf16.msra.mxu0 0
  %336 = vmatprep.subr.bf16.mxu0 0
  %337 = vmatpush2.bf16.msra.mxu0 0
  %338 = vmatprep.subr.bf16.mxu0 0
  %339 = vmatpush2.bf16.msra.mxu0 0
  %340 = vmatprep.subr.bf16.mxu0 0
  %341 = vmatpush2.bf16.msra.mxu0 0
  %342 = vmatprep.subr.bf16.mxu0 0
  %343 = vmatpush2.bf16.msra.mxu0 0
  %344 = vmatprep.subr.bf16.mxu0 0
  %345 = vmatpush2.bf16.msra.mxu0 0
  %346 = vmatprep.subr.bf16.mxu0 0
  %347 = vmatpush2.bf16.msra.mxu0 0
  %348 = vmatprep.mubr.bf16.mxu0 0
  %349 = vmatmul.mubr.bf16.gmra.mxu0 %v84
  %v350 = vpop.f32.mrf.mxu0
  %v351 = vadd.f32 %v266, %v350
  %v352 = vpop.f32.mrf.mxu0
  %v353 = vpop.f32.mrf.mxu0
  %v354 = vadd.f32 %v266, %v353
  %v355 = vpop.f32.mrf.mxu0
  %356 = vmatprep.mubr.bf16.mxu0 0
  %357 = vmatmul.mubr.bf16.gmra.mxu0 %v85
  %v358 = vpop.f32.mrf.mxu0
  %v359 = vadd.f32 %v266, %v358
  %v360 = vpop.f32.mrf.mxu0
  %v361 = vpop.f32.mrf.mxu0
  %v362 = vadd.f32 %v266, %v361
  %v363 = vpop.f32.mrf.mxu0
  %364 = vmatprep.mubr.bf16.mxu0 0
  %365 = vmatmul.mubr.bf16.gmra.mxu0 %v86
  %v366 = vpop.f32.mrf.mxu0
  %v367 = vadd.f32 %v266, %v366
  %v368 = vpop.f32.mrf.mxu0
  %v369 = vpop.f32.mrf.mxu0
  %v370 = vadd.f32 %v266, %v369
  %v371 = vpop.f32.mrf.mxu0
  %372 = vmatprep.mubr.bf16.mxu0 0
  %373 = vmatmul.mubr.bf16.gmra.mxu0 %v87
  %v374 = vpop.f32.mrf.mxu0
  %v375 = vadd.f32 %v266, %v374
  %v376 = vpop.f32.mrf.mxu0
  %v377 = vpop.f32.mrf.mxu0
  %v378 = vadd.f32 %v266, %v377
  %v379 = vpop.f32.mrf.mxu0
  %380 = vmatprep.mubr.bf16.mxu0 0
  %381 = vmatmul.mubr.bf16.gmra.mxu0 %v88
  %v382 = vpop.f32.mrf.mxu0
  %v383 = vadd.f32 %v266, %v382
  %v384 = vpop.f32.mrf.mxu0
  %v385 = vpop.f32.mrf.mxu0
  %v386 = vadd.f32 %v266, %v385
  %v387 = vpop.f32.mrf.mxu0
  %388 = vmatprep.mubr.bf16.mxu0 0
  %389 = vmatmul.mubr.bf16.gmra.mxu0 %v89
  %v390 = vpop.f32.mrf.mxu0
  %v391 = vadd.f32 %v266, %v390
  %v392 = vpop.f32.mrf.mxu0
  %v393 = vpop.f32.mrf.mxu0
  %v394 = vadd.f32 %v266, %v393
  %v395 = vpop.f32.mrf.mxu0
  %396 = vmatprep.mubr.bf16.mxu0 0
  %397 = vmatmul.mubr.bf16.gmra.mxu0 %v90
  %v398 = vpop.f32.mrf.mxu0
  %v399 = vadd.f32 %v266, %v398
  %v400 = vpop.f32.mrf.mxu0
  %v401 = vpop.f32.mrf.mxu0
  %v402 = vadd.f32 %v266, %v401
  %v403 = vpop.f32.mrf.mxu0
  %404 = vmatprep.mubr.bf16.mxu0 0
  %405 = vmatmul.mubr.bf16.gmra.mxu0 %v91
  %v406 = vpop.f32.mrf.mxu0
  %v407 = vadd.f32 %v266, %v406
  %v408 = vpop.f32.mrf.mxu0
  %v409 = vpop.f32.mrf.mxu0
  %v410 = vadd.f32 %v266, %v409
  %v411 = vpop.f32.mrf.mxu0
  %412 = vdwg.mxu0
  %v413 = vpack.c.bf16 %v186, %v183
  %v414 = vpack.c.bf16 %v194, %v191
  %v415 = vpack.c.bf16 %v202, %v199
  %v416 = vpack.c.bf16 %v210, %v207
  %v417 = vpack.c.bf16 %v218, %v215
  %v418 = vpack.c.bf16 %v226, %v223
  %v419 = vpack.c.bf16 %v234, %v231
  %v420 = vpack.c.bf16 %v242, %v239
  %v429 = vunpack.c.l.b16 %v413
  %v430 = vunpack.c.h.b16 %v413
  %v431 = vunpack.c.l.b16 %v414
  %v432 = vunpack.c.h.b16 %v414
  %v433 = vunpack.c.l.b16 %v415
  %v434 = vunpack.c.h.b16 %v415
  %v435 = vunpack.c.l.b16 %v416
  %v436 = vunpack.c.h.b16 %v416
  %v437 = vunpack.c.l.b16 %v417
  %v438 = vunpack.c.h.b16 %v417
  %v439 = vunpack.c.l.b16 %v418
  %v440 = vunpack.c.h.b16 %v418
  %v441 = vunpack.c.l.b16 %v419
  %v442 = vunpack.c.h.b16 %v419
  %v443 = vunpack.c.l.b16 %v420
  %v444 = vunpack.c.h.b16 %v420
  %v445 = vpack.c.b16 %v429, %v429
  %v446 = vpack.c.b16 %v430, %v430
  %v447 = vpack.c.b16 %v431, %v431
  %v448 = vpack.c.b16 %v432, %v432
  %v449 = vpack.c.b16 %v433, %v433
  %v450 = vpack.c.b16 %v434, %v434
  %v451 = vpack.c.b16 %v435, %v435
  %v452 = vpack.c.b16 %v436, %v436
  %v453 = vpack.c.b16 %v437, %v437
  %v454 = vpack.c.b16 %v438, %v438
  %v455 = vpack.c.b16 %v439, %v439
  %v456 = vpack.c.b16 %v440, %v440
  %v457 = vpack.c.b16 %v441, %v441
  %v458 = vpack.c.b16 %v442, %v442
  %v459 = vpack.c.b16 %v443, %v443
  %v460 = vpack.c.b16 %v444, %v444
  %477 = vst [vmem:[%s4] sm:$0xf] %v445
  %478 = vst [vmem:[%s4 + $0x4] sm:$0xf] %v446
  %479 = vst [vmem:[%s4 + $0x8] sm:$0xf] %v447
  %480 = vst [vmem:[%s4 + $0xc] sm:$0xf] %v448
  %481 = vst [vmem:[%s4 + $0x10] sm:$0xf] %v449
  %482 = vst [vmem:[%s4 + $0x14] sm:$0xf] %v450
  %483 = vst [vmem:[%s4 + $0x18] sm:$0xf] %v451
  %484 = vst [vmem:[%s4 + $0x1c] sm:$0xf] %v452
  %485 = vst [vmem:[%s4 + $0x20] sm:$0xf] %v453
  %486 = vst [vmem:[%s4 + $0x24] sm:$0xf] %v454
  %487 = vst [vmem:[%s4 + $0x28] sm:$0xf] %v455
  %488 = vst [vmem:[%s4 + $0x2c] sm:$0xf] %v456
  %489 = vst [vmem:[%s4 + $0x30] sm:$0xf] %v457
  %490 = vst [vmem:[%s4 + $0x34] sm:$0xf] %v458
  %491 = vst [vmem:[%s4 + $0x38] sm:$0xf] %v459
  %492 = vst [vmem:[%s4 + $0x3c] sm:$0xf] %v460
  %493 = vst [vmem:[%s5] sm:$0xff] %v351
  %494 = vst [vmem:[%s5 + $0x8] sm:$0xff] %v354
  %495 = vst [vmem:[%s5 + $0x10] sm:$0xff] %v359
  %496 = vst [vmem:[%s5 + $0x18] sm:$0xff] %v362
  %497 = vst [vmem:[%s5 + $0x20] sm:$0xff] %v367
  %498 = vst [vmem:[%s5 + $0x28] sm:$0xff] %v370
  %499 = vst [vmem:[%s5 + $0x30] sm:$0xff] %v375
  %500 = vst [vmem:[%s5 + $0x38] sm:$0xff] %v378
  %501 = vst [vmem:[%s5 + $0x40] sm:$0xff] %v383
  %502 = vst [vmem:[%s5 + $0x48] sm:$0xff] %v386
  %503 = vst [vmem:[%s5 + $0x50] sm:$0xff] %v391
  %504 = vst [vmem:[%s5 + $0x58] sm:$0xff] %v394
  %505 = vst [vmem:[%s5 + $0x60] sm:$0xff] %v399
  %506 = vst [vmem:[%s5 + $0x68] sm:$0xff] %v402
  %507 = vst [vmem:[%s5 + $0x70] sm:$0xff] %v407
  %508 = vst [vmem:[%s5 + $0x78] sm:$0xff] %v410
  // Predicated region
  $region18: #{gnn_encoder.4} parent=0 // pred_check
    _
  $region19: #{gnn_encoder.4} parent=0 // pred_check_branch
    %510 = sbr.rel (0) target = $region21
  $region20: #{gnn_encoder.4} parent=0 // pred_region
    _
  $region21: #{gnn_encoder.4} parent=0 // pred_fallthru
    _
  // Predicated region
  $region22: #{gnn_encoder.4} parent=0 // pred_check
    _
  $region23: #{gnn_encoder.4} parent=0 // pred_check_branch
    %512 = sbr.rel (0) target = $region25
  $region24: #{gnn_encoder.4} parent=0 // pred_region
    _
  $region25: #{gnn_encoder.4} parent=0 // pred_fallthru
    _
  // Predicated region
  $region26: #{gnn_encoder.4} parent=0 // pred_check
    _
  $region27: #{gnn_encoder.4} parent=0 // pred_check_branch
    %514 = sbr.rel (0) target = $region29
  $region28: #{gnn_encoder.4} parent=0 // pred_region
    _
  $region29: #{gnn_encoder.4} parent=0 // pred_fallthru
    _
  // Predicated region
  $region30: #{gnn_encoder.4} parent=0 // pred_check
    _
  $region31: #{gnn_encoder.4} parent=0 // pred_check_branch
    %516 = sbr.rel (0) target = $region33
  $region32: #{gnn_encoder.4} parent=0 // pred_region
    _
  $region33: #{gnn_encoder.4} parent=0 // pred_fallthru
    _

// kernel: gnn_encoder.5
$region0: #{gnn_encoder.5}
  #allocation0 [shape = 'u32[]', space=smem, size = 0x4, offset = 0x4, fixed_abs, tag = 'smem constant byte address 0x4 - core index']
  #allocation1 [shape = 'u32[144,128]{1,0:T(1,128)}', space=vmem, size = 0x12000, scoped, tag = 'internal scratch']
  #allocation2 [shape = 'f32[128,128]{1,0:T(8,128)}', space=vmem, size = 0x10000, scoped, tag = 'scratch operand']
  %s0 = inlined_call_operand.vmem [shape: bf16[128,128], index: 0, kind: input, shape index: {}]
  %s1 = inlined_call_operand.vmem [shape: bf16[128,128], index: 1, kind: input, shape index: {}]
  %s2 = inlined_call_operand.vmem [shape: f32[128,128], index: 2, kind: input, shape index: {}]
  %s3 = inlined_call_operand.vmem [shape: bf16[128,128], index: 3, kind: output, shape index: {}]
  %s4 = sld [smem:[#allocation0]]
  $region30: #{gnn_encoder.5} parent=0
    _
  %s6 = ssub.s32 1, %s4
  %s7 = scalar_select 0, %s6, %s4
  // Predicated region
  $region2: #{gnn_encoder.5} parent=0 // pred_check
    _
  $region3: #{gnn_encoder.5} parent=0 // pred_check_branch
    %9 = sbr.rel (0) target = $region5
  $region4: #{gnn_encoder.5} parent=0 // pred_region
    _
  $region5: #{gnn_encoder.5} parent=0 // pred_fallthru
    _
  // Predicated region
  $region6: #{gnn_encoder.5} parent=0 // pred_check
    _
  $region7: #{gnn_encoder.5} parent=0 // pred_check_branch
    %11 = sbr.rel (0) target = $region9
  $region8: #{gnn_encoder.5} parent=0 // pred_region
    _
  $region9: #{gnn_encoder.5} parent=0 // pred_fallthru
    _
  // Predicated region
  $region10: #{gnn_encoder.5} parent=0 // pred_check
    _
  $region11: #{gnn_encoder.5} parent=0 // pred_check_branch
    %13 = sbr.rel (0) target = $region13
  $region12: #{gnn_encoder.5} parent=0 // pred_region
    _
  $region13: #{gnn_encoder.5} parent=0 // pred_fallthru
    _
  %p15 = scmp.eq.s32.totalorder 0, 0
  // Predicated region
  $region14: #{gnn_encoder.5} parent=0 // pred_check
    %p16 = pneg %p15
  $region15: #{gnn_encoder.5} parent=0 // pred_check_branch
    %18 = sbr.rel (%p16) target = $region17
  $region16: #{gnn_encoder.5} parent=0 // pred_region
    %19 = vst [vmem:[#allocation2] sm:$0xff] 0.0
    %20 = vst [vmem:[#allocation2 + $0x8] sm:$0xff] 0.0
    %21 = vst [vmem:[#allocation2 + $0x10] sm:$0xff] 0.0
    %22 = vst [vmem:[#allocation2 + $0x18] sm:$0xff] 0.0
    %23 = vst [vmem:[#allocation2 + $0x20] sm:$0xff] 0.0
    %24 = vst [vmem:[#allocation2 + $0x28] sm:$0xff] 0.0
    %25 = vst [vmem:[#allocation2 + $0x30] sm:$0xff] 0.0
    %26 = vst [vmem:[#allocation2 + $0x38] sm:$0xff] 0.0
    %27 = vst [vmem:[#allocation2 + $0x40] sm:$0xff] 0.0
    %28 = vst [vmem:[#allocation2 + $0x48] sm:$0xff] 0.0
    %29 = vst [vmem:[#allocation2 + $0x50] sm:$0xff] 0.0
    %30 = vst [vmem:[#allocation2 + $0x58] sm:$0xff] 0.0
    %31 = vst [vmem:[#allocation2 + $0x60] sm:$0xff] 0.0
    %32 = vst [vmem:[#allocation2 + $0x68] sm:$0xff] 0.0
    %33 = vst [vmem:[#allocation2 + $0x70] sm:$0xff] 0.0
    %34 = vst [vmem:[#allocation2 + $0x78] sm:$0xff] 0.0
  $region17: #{gnn_encoder.5} parent=0 // pred_fallthru
    _
  %v35 = vld [vmem:[#allocation2] sm:$0xff]
  %v36 = vld [vmem:[#allocation2 + $0x8] sm:$0xff]
  %v37 = vld [vmem:[#allocation2 + $0x10] sm:$0xff]
  %v38 = vld [vmem:[#allocation2 + $0x18] sm:$0xff]
  %v39 = vld [vmem:[#allocation2 + $0x20] sm:$0xff]
  %v40 = vld [vmem:[#allocation2 + $0x28] sm:$0xff]
  %v41 = vld [vmem:[#allocation2 + $0x30] sm:$0xff]
  %v42 = vld [vmem:[#allocation2 + $0x38] sm:$0xff]
  %v43 = vld [vmem:[#allocation2 + $0x40] sm:$0xff]
  %v44 = vld [vmem:[#allocation2 + $0x48] sm:$0xff]
  %v45 = vld [vmem:[#allocation2 + $0x50] sm:$0xff]
  %v46 = vld [vmem:[#allocation2 + $0x58] sm:$0xff]
  %v47 = vld [vmem:[#allocation2 + $0x60] sm:$0xff]
  %v48 = vld [vmem:[#allocation2 + $0x68] sm:$0xff]
  %v49 = vld [vmem:[#allocation2 + $0x70] sm:$0xff]
  %v50 = vld [vmem:[#allocation2 + $0x78] sm:$0xff]
  %v51 = vld [vmem:[%s0] sm:$0xf]
  %v52 = vld [vmem:[%s0 + $0x4] sm:$0xf]
  %v53 = vld [vmem:[%s0 + $0x8] sm:$0xf]
  %v54 = vld [vmem:[%s0 + $0xc] sm:$0xf]
  %v55 = vld [vmem:[%s0 + $0x10] sm:$0xf]
  %v56 = vld [vmem:[%s0 + $0x14] sm:$0xf]
  %v57 = vld [vmem:[%s0 + $0x18] sm:$0xf]
  %v58 = vld [vmem:[%s0 + $0x1c] sm:$0xf]
  %v59 = vld [vmem:[%s0 + $0x20] sm:$0xf]
  %v60 = vld [vmem:[%s0 + $0x24] sm:$0xf]
  %v61 = vld [vmem:[%s0 + $0x28] sm:$0xf]
  %v62 = vld [vmem:[%s0 + $0x2c] sm:$0xf]
  %v63 = vld [vmem:[%s0 + $0x30] sm:$0xf]
  %v64 = vld [vmem:[%s0 + $0x34] sm:$0xf]
  %v65 = vld [vmem:[%s0 + $0x38] sm:$0xf]
  %v66 = vld [vmem:[%s0 + $0x3c] sm:$0xf]
  %v67 = vld [vmem:[%s1] sm:$0xf]
  %v68 = vld [vmem:[%s1 + $0x4] sm:$0xf]
  %v69 = vld [vmem:[%s1 + $0x8] sm:$0xf]
  %v70 = vld [vmem:[%s1 + $0xc] sm:$0xf]
  %v71 = vld [vmem:[%s1 + $0x10] sm:$0xf]
  %v72 = vld [vmem:[%s1 + $0x14] sm:$0xf]
  %v73 = vld [vmem:[%s1 + $0x18] sm:$0xf]
  %v74 = vld [vmem:[%s1 + $0x1c] sm:$0xf]
  %v75 = vld [vmem:[%s1 + $0x20] sm:$0xf]
  %v76 = vld [vmem:[%s1 + $0x24] sm:$0xf]
  %v77 = vld [vmem:[%s1 + $0x28] sm:$0xf]
  %v78 = vld [vmem:[%s1 + $0x2c] sm:$0xf]
  %v79 = vld [vmem:[%s1 + $0x30] sm:$0xf]
  %v80 = vld [vmem:[%s1 + $0x34] sm:$0xf]
  %v81 = vld [vmem:[%s1 + $0x38] sm:$0xf]
  %v82 = vld [vmem:[%s1 + $0x3c] sm:$0xf]
  %v99 = vunpack.c.l.b16 %v51
  %v100 = vunpack.c.l.b16 %v52
  %v101 = vunpack.c.l.b16 %v53
  %v102 = vunpack.c.l.b16 %v54
  %v103 = vunpack.c.l.b16 %v55
  %v104 = vunpack.c.l.b16 %v56
  %v105 = vunpack.c.l.b16 %v57
  %v106 = vunpack.c.l.b16 %v58
  %v107 = vunpack.c.l.b16 %v59
  %v108 = vunpack.c.l.b16 %v60
  %v109 = vunpack.c.l.b16 %v61
  %v110 = vunpack.c.l.b16 %v62
  %v111 = vunpack.c.l.b16 %v63
  %v112 = vunpack.c.l.b16 %v64
  %v113 = vunpack.c.l.b16 %v65
  %v114 = vunpack.c.l.b16 %v66
  %v115 = vpack.c.b16 %v100, %v99
  %v116 = vpack.c.b16 %v102, %v101
  %v117 = vpack.c.b16 %v104, %v103
  %v118 = vpack.c.b16 %v106, %v105
  %v119 = vpack.c.b16 %v108, %v107
  %v120 = vpack.c.b16 %v110, %v109
  %v121 = vpack.c.b16 %v112, %v111
  %v122 = vpack.c.b16 %v114, %v113
  %v147 = vunpack.c.l.b16 %v67
  %v148 = vunpack.c.l.b16 %v68
  %v149 = vunpack.c.l.b16 %v69
  %v150 = vunpack.c.l.b16 %v70
  %v151 = vunpack.c.l.b16 %v71
  %v152 = vunpack.c.l.b16 %v72
  %v153 = vunpack.c.l.b16 %v73
  %v154 = vunpack.c.l.b16 %v74
  %v155 = vunpack.c.l.b16 %v75
  %v156 = vunpack.c.l.b16 %v76
  %v157 = vunpack.c.l.b16 %v77
  %v158 = vunpack.c.l.b16 %v78
  %v159 = vunpack.c.l.b16 %v79
  %v160 = vunpack.c.l.b16 %v80
  %v161 = vunpack.c.l.b16 %v81
  %v162 = vunpack.c.l.b16 %v82
  %v163 = vpack.c.b16 %v148, %v147
  %v164 = vpack.c.b16 %v150, %v149
  %v165 = vpack.c.b16 %v152, %v151
  %v166 = vpack.c.b16 %v154, %v153
  %v167 = vpack.c.b16 %v156, %v155
  %v168 = vpack.c.b16 %v158, %v157
  %v169 = vpack.c.b16 %v160, %v159
  %v170 = vpack.c.b16 %v162, %v161
  %179 = vmatprep.subr.bf16.mxu0 0
  %180 = vmatpush1.bf16.msra.mxu0 %v170
  %181 = vmatprep.subr.bf16.mxu0 0
  %182 = vmatpush1.bf16.msra.mxu0 %v169
  %183 = vmatprep.subr.bf16.mxu0 0
  %184 = vmatpush1.bf16.msra.mxu0 %v168
  %185 = vmatprep.subr.bf16.mxu0 0
  %186 = vmatpush1.bf16.msra.mxu0 %v167
  %187 = vmatprep.subr.bf16.mxu0 0
  %188 = vmatpush1.bf16.msra.mxu0 %v166
  %189 = vmatprep.subr.bf16.mxu0 0
  %190 = vmatpush1.bf16.msra.mxu0 %v165
  %191 = vmatprep.subr.bf16.mxu0 0
  %192 = vmatpush1.bf16.msra.mxu0 %v164
  %193 = vmatprep.subr.bf16.mxu0 0
  %194 = vmatpush1.bf16.msra.mxu0 %v163
  %195 = vmatprep.subr.bf16.mxu0 0
  %196 = vmatpush2.bf16.msra.mxu0 0
  %197 = vmatprep.subr.bf16.mxu0 0
  %198 = vmatpush2.bf16.msra.mxu0 0
  %199 = vmatprep.subr.bf16.mxu0 0
  %200 = vmatpush2.bf16.msra.mxu0 0
  %201 = vmatprep.subr.bf16.mxu0 0
  %202 = vmatpush2.bf16.msra.mxu0 0
  %203 = vmatprep.subr.bf16.mxu0 0
  %204 = vmatpush2.bf16.msra.mxu0 0
  %205 = vmatprep.subr.bf16.mxu0 0
  %206 = vmatpush2.bf16.msra.mxu0 0
  %207 = vmatprep.subr.bf16.mxu0 0
  %208 = vmatpush2.bf16.msra.mxu0 0
  %209 = vmatprep.subr.bf16.mxu0 0
  %210 = vmatpush2.bf16.msra.mxu0 0
  %211 = vmatprep.mubr.bf16.mxu0 0
  %212 = vmatmul.mubr.bf16.gmra.mxu0 %v115
  %v213 = vpop.f32.mrf.mxu0
  %v214 = vadd.f32 0.0, %v213
  %v215 = vpop.f32.mrf.mxu0
  %v216 = vpop.f32.mrf.mxu0
  %v217 = vadd.f32 0.0, %v216
  %v218 = vpop.f32.mrf.mxu0
  %219 = vmatprep.mubr.bf16.mxu0 0
  %220 = vmatmul.mubr.bf16.gmra.mxu0 %v116
  %v221 = vpop.f32.mrf.mxu0
  %v222 = vadd.f32 0.0, %v221
  %v223 = vpop.f32.mrf.mxu0
  %v224 = vpop.f32.mrf.mxu0
  %v225 = vadd.f32 0.0, %v224
  %v226 = vpop.f32.mrf.mxu0
  %227 = vmatprep.mubr.bf16.mxu0 0
  %228 = vmatmul.mubr.bf16.gmra.mxu0 %v117
  %v229 = vpop.f32.mrf.mxu0
  %v230 = vadd.f32 0.0, %v229
  %v231 = vpop.f32.mrf.mxu0
  %v232 = vpop.f32.mrf.mxu0
  %v233 = vadd.f32 0.0, %v232
  %v234 = vpop.f32.mrf.mxu0
  %235 = vmatprep.mubr.bf16.mxu0 0
  %236 = vmatmul.mubr.bf16.gmra.mxu0 %v118
  %v237 = vpop.f32.mrf.mxu0
  %v238 = vadd.f32 0.0, %v237
  %v239 = vpop.f32.mrf.mxu0
  %v240 = vpop.f32.mrf.mxu0
  %v241 = vadd.f32 0.0, %v240
  %v242 = vpop.f32.mrf.mxu0
  %243 = vmatprep.mubr.bf16.mxu0 0
  %244 = vmatmul.mubr.bf16.gmra.mxu0 %v119
  %v245 = vpop.f32.mrf.mxu0
  %v246 = vadd.f32 0.0, %v245
  %v247 = vpop.f32.mrf.mxu0
  %v248 = vpop.f32.mrf.mxu0
  %v249 = vadd.f32 0.0, %v248
  %v250 = vpop.f32.mrf.mxu0
  %251 = vmatprep.mubr.bf16.mxu0 0
  %252 = vmatmul.mubr.bf16.gmra.mxu0 %v120
  %v253 = vpop.f32.mrf.mxu0
  %v254 = vadd.f32 0.0, %v253
  %v255 = vpop.f32.mrf.mxu0
  %v256 = vpop.f32.mrf.mxu0
  %v257 = vadd.f32 0.0, %v256
  %v258 = vpop.f32.mrf.mxu0
  %259 = vmatprep.mubr.bf16.mxu0 0
  %260 = vmatmul.mubr.bf16.gmra.mxu0 %v121
  %v261 = vpop.f32.mrf.mxu0
  %v262 = vadd.f32 0.0, %v261
  %v263 = vpop.f32.mrf.mxu0
  %v264 = vpop.f32.mrf.mxu0
  %v265 = vadd.f32 0.0, %v264
  %v266 = vpop.f32.mrf.mxu0
  %267 = vmatprep.mubr.bf16.mxu0 0
  %268 = vmatmul.mubr.bf16.gmra.mxu0 %v122
  %v269 = vpop.f32.mrf.mxu0
  %v270 = vadd.f32 0.0, %v269
  %v271 = vpop.f32.mrf.mxu0
  %v272 = vpop.f32.mrf.mxu0
  %v273 = vadd.f32 0.0, %v272
  %v274 = vpop.f32.mrf.mxu0
  %275 = vdwg.mxu0
  %v276 = vadd.f32 %v35, %v214
  %v277 = vadd.f32 %v36, %v217
  %v278 = vadd.f32 %v37, %v222
  %v279 = vadd.f32 %v38, %v225
  %v280 = vadd.f32 %v39, %v230
  %v281 = vadd.f32 %v40, %v233
  %v282 = vadd.f32 %v41, %v238
  %v283 = vadd.f32 %v42, %v241
  %v284 = vadd.f32 %v43, %v246
  %v285 = vadd.f32 %v44, %v249
  %v286 = vadd.f32 %v45, %v254
  %v287 = vadd.f32 %v46, %v257
  %v288 = vadd.f32 %v47, %v262
  %v289 = vadd.f32 %v48, %v265
  %v290 = vadd.f32 %v49, %v270
  %v291 = vadd.f32 %v50, %v273
  %292 = vst [vmem:[#allocation2] sm:$0xff] %v276
  %293 = vst [vmem:[#allocation2 + $0x8] sm:$0xff] %v277
  %294 = vst [vmem:[#allocation2 + $0x10] sm:$0xff] %v278
  %295 = vst [vmem:[#allocation2 + $0x18] sm:$0xff] %v279
  %296 = vst [vmem:[#allocation2 + $0x20] sm:$0xff] %v280
  %297 = vst [vmem:[#allocation2 + $0x28] sm:$0xff] %v281
  %298 = vst [vmem:[#allocation2 + $0x30] sm:$0xff] %v282
  %299 = vst [vmem:[#allocation2 + $0x38] sm:$0xff] %v283
  %300 = vst [vmem:[#allocation2 + $0x40] sm:$0xff] %v284
  %301 = vst [vmem:[#allocation2 + $0x48] sm:$0xff] %v285
  %302 = vst [vmem:[#allocation2 + $0x50] sm:$0xff] %v286
  %303 = vst [vmem:[#allocation2 + $0x58] sm:$0xff] %v287
  %304 = vst [vmem:[#allocation2 + $0x60] sm:$0xff] %v288
  %305 = vst [vmem:[#allocation2 + $0x68] sm:$0xff] %v289
  %306 = vst [vmem:[#allocation2 + $0x70] sm:$0xff] %v290
  %307 = vst [vmem:[#allocation2 + $0x78] sm:$0xff] %v291
  // Predicated region
  $region18: #{gnn_encoder.5} parent=0 // pred_check
    %p308 = pneg %p15
  $region19: #{gnn_encoder.5} parent=0 // pred_check_branch
    %310 = sbr.rel (%p308) target = $region21
  $region20: #{gnn_encoder.5} parent=0 // pred_region
    %v311 = vld [vmem:[#allocation2] sm:$0xff]
    %v312 = vld [vmem:[#allocation2 + $0x8] sm:$0xff]
    %v313 = vld [vmem:[#allocation2 + $0x10] sm:$0xff]
    %v314 = vld [vmem:[#allocation2 + $0x18] sm:$0xff]
    %v315 = vld [vmem:[#allocation2 + $0x20] sm:$0xff]
    %v316 = vld [vmem:[#allocation2 + $0x28] sm:$0xff]
    %v317 = vld [vmem:[#allocation2 + $0x30] sm:$0xff]
    %v318 = vld [vmem:[#allocation2 + $0x38] sm:$0xff]
    %v319 = vld [vmem:[#allocation2 + $0x40] sm:$0xff]
    %v320 = vld [vmem:[#allocation2 + $0x48] sm:$0xff]
    %v321 = vld [vmem:[#allocation2 + $0x50] sm:$0xff]
    %v322 = vld [vmem:[#allocation2 + $0x58] sm:$0xff]
    %v323 = vld [vmem:[#allocation2 + $0x60] sm:$0xff]
    %v324 = vld [vmem:[#allocation2 + $0x68] sm:$0xff]
    %v325 = vld [vmem:[#allocation2 + $0x70] sm:$0xff]
    %v326 = vld [vmem:[#allocation2 + $0x78] sm:$0xff]
    %v327 = vld [vmem:[%s2] sm:$0xff]
    %v328 = vld [vmem:[%s2 + $0x8] sm:$0xff]
    %v329 = vld [vmem:[%s2 + $0x10] sm:$0xff]
    %v330 = vld [vmem:[%s2 + $0x18] sm:$0xff]
    %v331 = vld [vmem:[%s2 + $0x20] sm:$0xff]
    %v332 = vld [vmem:[%s2 + $0x28] sm:$0xff]
    %v333 = vld [vmem:[%s2 + $0x30] sm:$0xff]
    %v334 = vld [vmem:[%s2 + $0x38] sm:$0xff]
    %v335 = vld [vmem:[%s2 + $0x40] sm:$0xff]
    %v336 = vld [vmem:[%s2 + $0x48] sm:$0xff]
    %v337 = vld [vmem:[%s2 + $0x50] sm:$0xff]
    %v338 = vld [vmem:[%s2 + $0x58] sm:$0xff]
    %v339 = vld [vmem:[%s2 + $0x60] sm:$0xff]
    %v340 = vld [vmem:[%s2 + $0x68] sm:$0xff]
    %v341 = vld [vmem:[%s2 + $0x70] sm:$0xff]
    %v342 = vld [vmem:[%s2 + $0x78] sm:$0xff]
    %v343 = vadd.f32 %v311, %v327
    %v344 = vadd.f32 %v312, %v328
    %v345 = vadd.f32 %v313, %v329
    %v346 = vadd.f32 %v314, %v330
    %v347 = vadd.f32 %v315, %v331
    %v348 = vadd.f32 %v316, %v332
    %v349 = vadd.f32 %v317, %v333
    %v350 = vadd.f32 %v318, %v334
    %v351 = vadd.f32 %v319, %v335
    %v352 = vadd.f32 %v320, %v336
    %v353 = vadd.f32 %v321, %v337
    %v354 = vadd.f32 %v322, %v338
    %v355 = vadd.f32 %v323, %v339
    %v356 = vadd.f32 %v324, %v340
    %v357 = vadd.f32 %v325, %v341
    %v358 = vadd.f32 %v326, %v342
    %v359 = vmax.f32 %v343, 0.0
    %v360 = vmax.f32 %v344, 0.0
    %v361 = vmax.f32 %v345, 0.0
    %v362 = vmax.f32 %v346, 0.0
    %v363 = vmax.f32 %v347, 0.0
    %v364 = vmax.f32 %v348, 0.0
    %v365 = vmax.f32 %v349, 0.0
    %v366 = vmax.f32 %v350, 0.0
    %v367 = vmax.f32 %v351, 0.0
    %v368 = vmax.f32 %v352, 0.0
    %v369 = vmax.f32 %v353, 0.0
    %v370 = vmax.f32 %v354, 0.0
    %v371 = vmax.f32 %v355, 0.0
    %v372 = vmax.f32 %v356, 0.0
    %v373 = vmax.f32 %v357, 0.0
    %v374 = vmax.f32 %v358, 0.0
    %v375 = vpack.c.bf16 %v360, %v359
    %v376 = vpack.c.bf16 %v362, %v361
    %v377 = vpack.c.bf16 %v364, %v363
    %v378 = vpack.c.bf16 %v366, %v365
    %v379 = vpack.c.bf16 %v368, %v367
    %v380 = vpack.c.bf16 %v370, %v369
    %v381 = vpack.c.bf16 %v372, %v371
    %v382 = vpack.c.bf16 %v374, %v373
    %v391 = vunpack.c.l.b16 %v375
    %v392 = vunpack.c.h.b16 %v375
    %v393 = vunpack.c.l.b16 %v376
    %v394 = vunpack.c.h.b16 %v376
    %v395 = vunpack.c.l.b16 %v377
    %v396 = vunpack.c.h.b16 %v377
    %v397 = vunpack.c.l.b16 %v378
    %v398 = vunpack.c.h.b16 %v378
    %v399 = vunpack.c.l.b16 %v379
    %v400 = vunpack.c.h.b16 %v379
    %v401 = vunpack.c.l.b16 %v380
    %v402 = vunpack.c.h.b16 %v380
    %v403 = vunpack.c.l.b16 %v381
    %v404 = vunpack.c.h.b16 %v381
    %v405 = vunpack.c.l.b16 %v382
    %v406 = vunpack.c.h.b16 %v382
    %v407 = vpack.c.b16 %v391, %v391
    %v408 = vpack.c.b16 %v392, %v392
    %v409 = vpack.c.b16 %v393, %v393
    %v410 = vpack.c.b16 %v394, %v394
    %v411 = vpack.c.b16 %v395, %v395
    %v412 = vpack.c.b16 %v396, %v396
    %v413 = vpack.c.b16 %v397, %v397
    %v414 = vpack.c.b16 %v398, %v398
    %v415 = vpack.c.b16 %v399, %v399
    %v416 = vpack.c.b16 %v400, %v400
    %v417 = vpack.c.b16 %v401, %v401
    %v418 = vpack.c.b16 %v402, %v402
    %v419 = vpack.c.b16 %v403, %v403
    %v420 = vpack.c.b16 %v404, %v404
    %v421 = vpack.c.b16 %v405, %v405
    %v422 = vpack.c.b16 %v406, %v406
    %439 = vst [vmem:[%s3] sm:$0xf] %v407
    %440 = vst [vmem:[%s3 + $0x4] sm:$0xf] %v408
    %441 = vst [vmem:[%s3 + $0x8] sm:$0xf] %v409
    %442 = vst [vmem:[%s3 + $0xc] sm:$0xf] %v410
    %443 = vst [vmem:[%s3 + $0x10] sm:$0xf] %v411
    %444 = vst [vmem:[%s3 + $0x14] sm:$0xf] %v412
    %445 = vst [vmem:[%s3 + $0x18] sm:$0xf] %v413
    %446 = vst [vmem:[%s3 + $0x1c] sm:$0xf] %v414
    %447 = vst [vmem:[%s3 + $0x20] sm:$0xf] %v415
    %448 = vst [vmem:[%s3 + $0x24] sm:$0xf] %v416
    %449 = vst [vmem:[%s3 + $0x28] sm:$0xf] %v417
    %450 = vst [vmem:[%s3 + $0x2c] sm:$0xf] %v418
    %451 = vst [vmem:[%s3 + $0x30] sm:$0xf] %v419
    %452 = vst [vmem:[%s3 + $0x34] sm:$0xf] %v420
    %453 = vst [vmem:[%s3 + $0x38] sm:$0xf] %v421
    %454 = vst [vmem:[%s3 + $0x3c] sm:$0xf] %v422
  $region21: #{gnn_encoder.5} parent=0 // pred_fallthru
    _
  // Predicated region
  $region22: #{gnn_encoder.5} parent=0 // pred_check
    _
  $region23: #{gnn_encoder.5} parent=0 // pred_check_branch
    %456 = sbr.rel (0) target = $region25
  $region24: #{gnn_encoder.5} parent=0 // pred_region
    _
  $region25: #{gnn_encoder.5} parent=0 // pred_fallthru
    _
  // Predicated region
  $region26: #{gnn_encoder.5} parent=0 // pred_check
    _
  $region27: #{gnn_encoder.5} parent=0 // pred_check_branch
    %458 = sbr.rel (0) target = $region29
  $region28: #{gnn_encoder.5} parent=0 // pred_region
    _
  $region29: #{gnn_encoder.5} parent=0 // pred_fallthru
    _

</llo_original>
